<compile_context>
chip_gen: v7x
topology: tpu7x:2x2x1
jax: 0.10.0
libtpu: 0.0.40
codegen_flags: <defaults>
</compile_context>

<pallas_src>
import math
import jax
import jax.numpy as jnp
from jax.experimental import pallas as pl
from jax.experimental.pallas import tpu as pltpu


def _round_up(x, m):
    return (x + m - 1) // m * m


def _vmem_limit_bytes():
    """Generation-aware VMEM limit: ~3/4 of physical (v5e/v6e ~96 MiB, v7x ~48 MiB)."""
    cap = None
    try:
        cap = int(pltpu.get_tpu_info().vmem_capacity_bytes)
    except Exception:
        cap = None
    if not cap:
        kind = jax.devices()[0].device_kind.lower()
        cap = (64 if "v7" in kind else 128) * 1024 * 1024
    return (cap * 3) // 4


def _pick_row_tile(H, W, Cp, Cin, Hp, Wp, vmem_limit, in_itemsize):
    """Largest divisor of H whose per-step VMEM footprint fits the budget.

    Budget model: the padded input image and the weights stay resident
    (double-buffered); per row-tile we need ~6 f32 copies of the (th, W, Cp)
    output tile (double-buffered output + f32 accumulator + GELU temporaries +
    im2col scratch margin).  Prefers th with (th*W) % 8 == 0 (sublane-aligned
    matmul M dim).
    """
    resident = 2 * (Hp * Wp * Cin + 9 * Cin * Cp) * in_itemsize
    budget = max(vmem_limit - resident, 4 * 1024 * 1024)
    per_row = W * Cp * 4
    max_rows = max(1, int(budget // (6 * per_row)))
    divs = [d for d in range(1, H + 1) if H % d == 0 and d <= max_rows] or [1]
    aligned = [d for d in divs if (d * W) % 8 == 0]
    # TODO(synk): for prime H this degrades to th=1; pad H or allow a masked tail.
    return max(aligned) if aligned else max(divs)


# ---------------------------------------------------------------------------
# Shared in-kernel helper: im2col for one row tile (into VMEM scratch) + one
# fat MXU matmul (K = 9*Cin), f32 accumulation.
# ---------------------------------------------------------------------------
def _conv_tile(x_ref, w_ref, patches_ref, th, W, Cin):
    # x_ref:       (1, H+2, W+2, Cin)  whole zero-padded image (resident per n)
    # w_ref:       (9*Cin, Cp)         taps flattened into the contraction dim
    # patches_ref: (th*W, 9*Cin)       VMEM scratch, written tap-by-tap
    row0 = pl.multiple_of(pl.program_id(1) * th, th)
    for kh in range(3):
        for kw in range(3):
            k0 = (kh * 3 + kw) * Cin
            win = x_ref[0, pl.ds(row0 + kh, th), kw:kw + W, :]      # (th, W, Cin)
            patches_ref[:, k0:k0 + Cin] = win.reshape(th * W, Cin)
    return jnp.dot(patches_ref[...], w_ref[...],
                   preferred_element_type=jnp.float32)              # (th*W, Cp) f32


# ---------------------------------------------------------------------------
# Kernel 1: per-(image, row-tile) BN partial statistics [sum, M2] (Welford-style).
# No conv output is written to HBM.
# ---------------------------------------------------------------------------
def _make_stats_kernel(th, W, Cin, Cp):
    inv_cnt = 1.0 / float(th * W)

    def kernel(x_ref, w_ref, stats_ref, patches_ref):
        acc = _conv_tile(x_ref, w_ref, patches_ref, th, W, Cin)     # (th*W, Cp) f32
        s1 = jnp.sum(acc, axis=0, keepdims=True)                    # (1, Cp)
        mu = s1 * inv_cnt
        d = acc - mu
        m2 = jnp.sum(d * d, axis=0, keepdims=True)                  # (1, Cp)
        stats_ref[...] = jnp.concatenate([s1, m2], axis=0).reshape(1, 1, 2, Cp)

    return kernel


# ---------------------------------------------------------------------------
# Kernel 2: recompute conv tile + folded BN affine + GELU, lane-dense store.
# ---------------------------------------------------------------------------
def _make_bn_gelu_kernel(th, W, Cin, Cp, approximate_gelu):
    inv_sqrt2 = 1.0 / math.sqrt(2.0)

    def kernel(x_ref, w_ref, scale_ref, shift_ref, o_ref, patches_ref):
        acc = _conv_tile(x_ref, w_ref, patches_ref, th, W, Cin)     # (th*W, Cp) f32
        z = acc * scale_ref[0, :] + shift_ref[0, :]
        if approximate_gelu:
            # tanh-approx GELU (EUP path) — worth it on v7x where exact erf's
            # VPU polynomial can become the binding unit.
            c = math.sqrt(2.0 / math.pi)
            g = 0.5 * z * (1.0 + jnp.tanh(c * (z + 0.044715 * z * z * z)))
        else:
            g = 0.5 * z * (1.0 + jax.lax.erf(z * inv_sqrt2))        # matches nn.GELU()
        o_ref[...] = g.reshape(1, th, W, Cp).astype(o_ref.dtype)

    return kernel


# ---------------------------------------------------------------------------
# Wrapper
# ---------------------------------------------------------------------------
def conv_bn_gelu(x_nchw, w, b, gamma, beta, *, eps=1e-5,
                 matmul_dtype=jnp.float32, approximate_gelu=False):
    """x_nchw: (N, Cin, H, W); w: (3, 3, Cin, Cout); b/gamma/beta: (Cout,).

    `b` (conv bias) is accepted for interface parity but intentionally unused:
    training-mode BatchNorm subtracts the batch mean immediately after the conv,
    so a per-channel constant cancels exactly.  (Do NOT reuse this path for
    eval-mode running-stats BN.)
    `matmul_dtype=jnp.bfloat16` is the production choice (MXU-native, halves
    input DMA); default stays f32 so the test matches the f32 reference tightly.
    """
    del b
    N, Cin, H, W = x_nchw.shape
    Cout = w.shape[-1]
    Cp = _round_up(Cout, 128)          # lane-dense channel axis (no masked stores)

    # NCHW -> NHWC and spatial zero-pad (padding=1); XLA fuses the two copies.
    x = jnp.transpose(x_nchw, (0, 2, 3, 1))
    x_pad = jnp.pad(x, ((0, 0), (1, 1), (1, 1), (0, 0))).astype(matmul_dtype)
    Hp, Wp = H + 2, W + 2

    # Fold the 9 taps into the contraction dim: (3,3,Cin,Cout) -> (9*Cin, Cp).
    wf = jnp.pad(w.reshape(9 * Cin, Cout), ((0, 0), (0, Cp - Cout))).astype(matmul_dtype)

    vmem_limit = _vmem_limit_bytes()
    itemsize = jnp.dtype(matmul_dtype).itemsize
    th = _pick_row_tile(H, W, Cp, Cin, Hp, Wp, vmem_limit, itemsize)
    nh = H // th

    x_spec = pl.BlockSpec((1, Hp, Wp, Cin), lambda n, h: (n, 0, 0, 0))
    w_spec = pl.BlockSpec((9 * Cin, Cp), lambda n, h: (0, 0))
    patches_scratch = pltpu.VMEM((th * W, 9 * Cin), matmul_dtype)
    cparams = pltpu.CompilerParams(
        dimension_semantics=("parallel", "parallel"),
        vmem_limit_bytes=vmem_limit)
    # TODO(synk): for very large Cin*H*W images, switch the x input to a
    # (th+2)-row halo'd block (pl.Element-indexed or manual DMA) instead of
    # keeping the whole padded image resident in VMEM.

    # ---- pass 1: BN batch-statistic partials (tiny (N, nh, 2, Cp) output) ----
    stats = pl.pallas_call(
        _make_stats_kernel(th, W, Cin, Cp),
        out_shape=jax.ShapeDtypeStruct((N, nh, 2, Cp), jnp.float32),
        grid_spec=pltpu.PrefetchScalarGridSpec(
            num_scalar_prefetch=0,
            grid=(N, nh),
            in_specs=[x_spec, w_spec],
            out_specs=pl.BlockSpec((1, 1, 2, Cp), lambda n, h: (n, h, 0, 0)),
            scratch_shapes=[patches_scratch]),
        compiler_params=cparams,
    )(x_pad, wf)

    # ---- combine per-tile (sum, M2) partials (Welford) and fold gamma/beta ----
    cnt_tile = float(th * W)
    total = float(N * H * W)
    s1 = stats[:, :, 0, :]                                   # (N, nh, Cp)
    m2 = stats[:, :, 1, :]                                   # (N, nh, Cp)
    mean = jnp.sum(s1, axis=(0, 1)) / total                  # (Cp,)
    mean_t = s1 / cnt_tile
    var = (jnp.sum(m2, axis=(0, 1))
           + cnt_tile * jnp.sum((mean_t - mean) ** 2, axis=(0, 1))) / total
    var = jnp.maximum(var, 0.0)                              # biased (training-mode) var
    inv_std = jax.lax.rsqrt(var + eps)
    gamma_p = jnp.pad(gamma, (0, Cp - Cout))
    beta_p = jnp.pad(beta, (0, Cp - Cout))
    scale = (gamma_p * inv_std).reshape(1, Cp).astype(jnp.float32)
    shift = (beta_p - mean * gamma_p * inv_std).reshape(1, Cp).astype(jnp.float32)

    # ---- pass 2: conv (recomputed, MXU has headroom) + BN affine + GELU ----
    y = pl.pallas_call(
        _make_bn_gelu_kernel(th, W, Cin, Cp, approximate_gelu),
        out_shape=jax.ShapeDtypeStruct((N, H, W, Cp), jnp.float32),
        grid_spec=pltpu.PrefetchScalarGridSpec(
            num_scalar_prefetch=0,
            grid=(N, nh),
            in_specs=[x_spec, w_spec,
                      pl.BlockSpec((1, Cp), lambda n, h: (0, 0)),
                      pl.BlockSpec((1, Cp), lambda n, h: (0, 0))],
            out_specs=pl.BlockSpec((1, th, W, Cp), lambda n, h: (n, h, 0, 0)),
            scratch_shapes=[patches_scratch]),
        compiler_params=cparams,
    )(x_pad, wf, scale, shift)

    # Drop channel padding; single NHWC -> NCHW transpose at the very end.
    # XLA fuses the :Cout slice into the transpose, so padded lanes are not re-read.
    # TODO(synk): return y[..., :Cout] directly if the consumer can take NHWC.
    return jnp.transpose(y[..., :Cout], (0, 3, 1, 2))


# ---------------------------------------------------------------------------
# Reference (plain JAX) for correctness check
# ---------------------------------------------------------------------------
def reference(x_nchw, w, b, gamma, beta):
    w_oihw = jnp.transpose(w, (3, 2, 0, 1))
    y = jax.lax.conv_general_dilated(
        x_nchw, w_oihw, window_strides=(1, 1), padding=((1, 1), (1, 1)),
        dimension_numbers=("NCHW", "OIHW", "NCHW"))
    y = y + b[None, :, None, None]
    mean = jnp.mean(y, axis=(0, 2, 3), keepdims=True)
    var = jnp.mean((y - mean) ** 2, axis=(0, 2, 3), keepdims=True)
    z = (y - mean) * jax.lax.rsqrt(var + 1e-5)
    z = z * gamma[None, :, None, None] + beta[None, :, None, None]
    return 0.5 * z * (1.0 + jax.lax.erf(z / math.sqrt(2.0)))


if __name__ == "__main__":
    key = jax.random.PRNGKey(0)
    N, Cin, Cout, H, W = 2, 4, 8, 16, 16

    k_x, k_w, k_b = jax.random.split(key, 3)
    x = jax.random.normal(k_x, (N, Cin, H, W), jnp.float32)
    fan_in = Cin * 3 * 3
    w = jax.random.normal(k_w, (3, 3, Cin, Cout), jnp.float32) / math.sqrt(fan_in)
    b = 0.01 * jax.random.normal(k_b, (Cout,), jnp.float32)
    gamma = jnp.ones((Cout,), jnp.float32)   # BatchNorm2d weight init
    beta = jnp.zeros((Cout,), jnp.float32)   # BatchNorm2d bias init

    out = jax.block_until_ready(conv_bn_gelu(x, w, b, gamma, beta))
    ref = jax.block_until_ready(reference(x, w, b, gamma, beta))

    assert out.shape == (N, Cout, H, W), out.shape
    err = float(jnp.max(jnp.abs(out - ref)))
    assert jnp.allclose(out, ref, atol=2e-4, rtol=2e-4), err
    print("KERNEL_OK")
</pallas_src>

<mosaic_0001>
module attributes {stable_mosaic.version = 11 : i64} {
  func.func @kernel(%arg0: i32, %arg1: i32, %arg2: memref<1x18x18x4xf32, #tpu.memory_space<vmem>>, %arg3: memref<36x128xf32, #tpu.memory_space<vmem>>, %arg4: memref<1x1x2x128xf32, #tpu.memory_space<vmem>>, %arg5: memref<256x36xf32, #tpu.memory_space<vmem>>) attributes {dimension_semantics = [#tpu.dimension_semantics<parallel>, #tpu.dimension_semantics<parallel>], iteration_bounds = array<i64: 2, 1>, scalar_prefetch = 0 : i64, scratch_operands = 1 : i64, tpu.core_type = #tpu.core_type<tc>, window_params = [{transform_indices = @transform_0, window_bounds = array<i64: 1, 18, 18, 4>}, {pipeline_mode = #tpu.pipeline_mode<synchronous>, transform_indices = @transform_1, window_bounds = array<i64: 36, 128>}, {transform_indices = @transform_2, window_bounds = array<i64: 1, 1, 2, 128>}]} {
    %c16_i32 = arith.constant 16 : i32
    %0 = arith.muli %arg1, %c16_i32 : i32
    %1 = tpu.assume_multiple %0, 16 : i32
    %c0_i32 = arith.constant 0 : i32
    %2 = arith.addi %1, %c0_i32 : i32
    %c0 = arith.constant 0 : index
    %3 = arith.index_cast %2 : i32 to index
    %c0_0 = arith.constant 0 : index
    %c0_1 = arith.constant 0 : index
    %4 = vector.load %arg2[%c0, %3, %c0_0, %c0_1] : memref<1x18x18x4xf32, #tpu.memory_space<vmem>>, vector<1x16x16x4xf32>
    %5 = vector.shape_cast %4 : vector<1x16x16x4xf32> to vector<16x16x4xf32>
    %6 = vector.shape_cast %5 : vector<16x16x4xf32> to vector<256x4xf32>
    %c0_2 = arith.constant 0 : index
    %c0_3 = arith.constant 0 : index
    %7 = vector.load %arg5[%c0_2, %c0_3] : memref<256x36xf32, #tpu.memory_space<vmem>>, vector<256x4xf32>
    tpu.vector_store %arg5[%c0_2, %c0_3], %6 {strides = array<i32>} : memref<256x36xf32, #tpu.memory_space<vmem>>, vector<256x4xf32>,
    %c0_i32_4 = arith.constant 0 : i32
    %8 = arith.addi %1, %c0_i32_4 : i32
    %c0_5 = arith.constant 0 : index
    %9 = arith.index_cast %8 : i32 to index
    %c1 = arith.constant 1 : index
    %c0_6 = arith.constant 0 : index
    %10 = vector.load %arg2[%c0_5, %9, %c1, %c0_6] : memref<1x18x18x4xf32, #tpu.memory_space<vmem>>, vector<1x16x16x4xf32>
    %11 = vector.shape_cast %10 : vector<1x16x16x4xf32> to vector<16x16x4xf32>
    %12 = vector.shape_cast %11 : vector<16x16x4xf32> to vector<256x4xf32>
    %c0_7 = arith.constant 0 : index
    %c4 = arith.constant 4 : index
    %13 = vector.load %arg5[%c0_7, %c4] : memref<256x36xf32, #tpu.memory_space<vmem>>, vector<256x4xf32>
    tpu.vector_store %arg5[%c0_7, %c4], %12 {strides = array<i32>} : memref<256x36xf32, #tpu.memory_space<vmem>>, vector<256x4xf32>,
    %c0_i32_8 = arith.constant 0 : i32
    %14 = arith.addi %1, %c0_i32_8 : i32
    %c0_9 = arith.constant 0 : index
    %15 = arith.index_cast %14 : i32 to index
    %c2 = arith.constant 2 : index
    %c0_10 = arith.constant 0 : index
    %16 = vector.load %arg2[%c0_9, %15, %c2, %c0_10] : memref<1x18x18x4xf32, #tpu.memory_space<vmem>>, vector<1x16x16x4xf32>
    %17 = vector.shape_cast %16 : vector<1x16x16x4xf32> to vector<16x16x4xf32>
    %18 = vector.shape_cast %17 : vector<16x16x4xf32> to vector<256x4xf32>
    %c0_11 = arith.constant 0 : index
    %c8 = arith.constant 8 : index
    %19 = vector.load %arg5[%c0_11, %c8] : memref<256x36xf32, #tpu.memory_space<vmem>>, vector<256x4xf32>
    tpu.vector_store %arg5[%c0_11, %c8], %18 {strides = array<i32>} : memref<256x36xf32, #tpu.memory_space<vmem>>, vector<256x4xf32>,
    %c1_i32 = arith.constant 1 : i32
    %20 = arith.addi %1, %c1_i32 : i32
    %c0_12 = arith.constant 0 : index
    %21 = arith.index_cast %20 : i32 to index
    %c0_13 = arith.constant 0 : index
    %c0_14 = arith.constant 0 : index
    %22 = vector.load %arg2[%c0_12, %21, %c0_13, %c0_14] : memref<1x18x18x4xf32, #tpu.memory_space<vmem>>, vector<1x16x16x4xf32>
    %23 = vector.shape_cast %22 : vector<1x16x16x4xf32> to vector<16x16x4xf32>
    %24 = vector.shape_cast %23 : vector<16x16x4xf32> to vector<256x4xf32>
    %c0_15 = arith.constant 0 : index
    %c12 = arith.constant 12 : index
    %25 = vector.load %arg5[%c0_15, %c12] : memref<256x36xf32, #tpu.memory_space<vmem>>, vector<256x4xf32>
    tpu.vector_store %arg5[%c0_15, %c12], %24 {strides = array<i32>} : memref<256x36xf32, #tpu.memory_space<vmem>>, vector<256x4xf32>,
    %c1_i32_16 = arith.constant 1 : i32
    %26 = arith.addi %1, %c1_i32_16 : i32
    %c0_17 = arith.constant 0 : index
    %27 = arith.index_cast %26 : i32 to index
    %c1_18 = arith.constant 1 : index
    %c0_19 = arith.constant 0 : index
    %28 = vector.load %arg2[%c0_17, %27, %c1_18, %c0_19] : memref<1x18x18x4xf32, #tpu.memory_space<vmem>>, vector<1x16x16x4xf32>
    %29 = vector.shape_cast %28 : vector<1x16x16x4xf32> to vector<16x16x4xf32>
    %30 = vector.shape_cast %29 : vector<16x16x4xf32> to vector<256x4xf32>
    %c0_20 = arith.constant 0 : index
    %c16 = arith.constant 16 : index
    %31 = vector.load %arg5[%c0_20, %c16] : memref<256x36xf32, #tpu.memory_space<vmem>>, vector<256x4xf32>
    tpu.vector_store %arg5[%c0_20, %c16], %30 {strides = array<i32>} : memref<256x36xf32, #tpu.memory_space<vmem>>, vector<256x4xf32>,
    %c1_i32_21 = arith.constant 1 : i32
    %32 = arith.addi %1, %c1_i32_21 : i32
    %c0_22 = arith.constant 0 : index
    %33 = arith.index_cast %32 : i32 to index
    %c2_23 = arith.constant 2 : index
    %c0_24 = arith.constant 0 : index
    %34 = vector.load %arg2[%c0_22, %33, %c2_23, %c0_24] : memref<1x18x18x4xf32, #tpu.memory_space<vmem>>, vector<1x16x16x4xf32>
    %35 = vector.shape_cast %34 : vector<1x16x16x4xf32> to vector<16x16x4xf32>
    %36 = vector.shape_cast %35 : vector<16x16x4xf32> to vector<256x4xf32>
    %c0_25 = arith.constant 0 : index
    %c20 = arith.constant 20 : index
    %37 = vector.load %arg5[%c0_25, %c20] : memref<256x36xf32, #tpu.memory_space<vmem>>, vector<256x4xf32>
    tpu.vector_store %arg5[%c0_25, %c20], %36 {strides = array<i32>} : memref<256x36xf32, #tpu.memory_space<vmem>>, vector<256x4xf32>,
    %c2_i32 = arith.constant 2 : i32
    %38 = arith.addi %1, %c2_i32 : i32
    %c0_26 = arith.constant 0 : index
    %39 = arith.index_cast %38 : i32 to index
    %c0_27 = arith.constant 0 : index
    %c0_28 = arith.constant 0 : index
    %40 = vector.load %arg2[%c0_26, %39, %c0_27, %c0_28] : memref<1x18x18x4xf32, #tpu.memory_space<vmem>>, vector<1x16x16x4xf32>
    %41 = vector.shape_cast %40 : vector<1x16x16x4xf32> to vector<16x16x4xf32>
    %42 = vector.shape_cast %41 : vector<16x16x4xf32> to vector<256x4xf32>
    %c0_29 = arith.constant 0 : index
    %c24 = arith.constant 24 : index
    %43 = vector.load %arg5[%c0_29, %c24] : memref<256x36xf32, #tpu.memory_space<vmem>>, vector<256x4xf32>
    tpu.vector_store %arg5[%c0_29, %c24], %42 {strides = array<i32>} : memref<256x36xf32, #tpu.memory_space<vmem>>, vector<256x4xf32>,
    %c2_i32_30 = arith.constant 2 : i32
    %44 = arith.addi %1, %c2_i32_30 : i32
    %c0_31 = arith.constant 0 : index
    %45 = arith.index_cast %44 : i32 to index
    %c1_32 = arith.constant 1 : index
    %c0_33 = arith.constant 0 : index
    %46 = vector.load %arg2[%c0_31, %45, %c1_32, %c0_33] : memref<1x18x18x4xf32, #tpu.memory_space<vmem>>, vector<1x16x16x4xf32>
    %47 = vector.shape_cast %46 : vector<1x16x16x4xf32> to vector<16x16x4xf32>
    %48 = vector.shape_cast %47 : vector<16x16x4xf32> to vector<256x4xf32>
    %c0_34 = arith.constant 0 : index
    %c28 = arith.constant 28 : index
    %49 = vector.load %arg5[%c0_34, %c28] : memref<256x36xf32, #tpu.memory_space<vmem>>, vector<256x4xf32>
    tpu.vector_store %arg5[%c0_34, %c28], %48 {strides = array<i32>} : memref<256x36xf32, #tpu.memory_space<vmem>>, vector<256x4xf32>,
    %c2_i32_35 = arith.constant 2 : i32
    %50 = arith.addi %1, %c2_i32_35 : i32
    %c0_36 = arith.constant 0 : index
    %51 = arith.index_cast %50 : i32 to index
    %c2_37 = arith.constant 2 : index
    %c0_38 = arith.constant 0 : index
    %52 = vector.load %arg2[%c0_36, %51, %c2_37, %c0_38] : memref<1x18x18x4xf32, #tpu.memory_space<vmem>>, vector<1x16x16x4xf32>
    %53 = vector.shape_cast %52 : vector<1x16x16x4xf32> to vector<16x16x4xf32>
    %54 = vector.shape_cast %53 : vector<16x16x4xf32> to vector<256x4xf32>
    %c0_39 = arith.constant 0 : index
    %c32 = arith.constant 32 : index
    %55 = vector.load %arg5[%c0_39, %c32] : memref<256x36xf32, #tpu.memory_space<vmem>>, vector<256x4xf32>
    tpu.vector_store %arg5[%c0_39, %c32], %54 {strides = array<i32>} : memref<256x36xf32, #tpu.memory_space<vmem>>, vector<256x4xf32>,
    %c0_40 = arith.constant 0 : index
    %c0_41 = arith.constant 0 : index
    %56 = vector.load %arg5[%c0_40, %c0_41] : memref<256x36xf32, #tpu.memory_space<vmem>>, vector<256x36xf32>
    %c0_42 = arith.constant 0 : index
    %c0_43 = arith.constant 0 : index
    %57 = vector.load %arg3[%c0_42, %c0_43] : memref<36x128xf32, #tpu.memory_space<vmem>>, vector<36x128xf32>
    %cst = arith.constant dense<0.000000e+00> : vector<256x128xf32>
    %58 = tpu.matmul %56, %57, %cst {dimension_numbers = #tpu.dot_dimension_numbers<[1], [0], [0], [1], [0, 0, 1, 1], [], []>} : vector<256x36xf32>, vector<36x128xf32>, vector<256x128xf32> -> vector<256x128xf32>
    %cst_44 = arith.constant dense<0.000000e+00> : vector<128xf32>
    %59 = vector.multi_reduction <add>, %58, %cst_44 [0] : vector<256x128xf32> to vector<128xf32>
    %60 = vector.shape_cast %59 : vector<128xf32> to vector<1x128xf32>
    %cst_45 = arith.constant 3.906250e-03 : f32
    %61 = vector.broadcast %cst_45 : f32 to vector<1x128xf32>
    %62 = arith.mulf %60, %61 : vector<1x128xf32>
    %63 = vector.broadcast %62 : vector<1x128xf32> to vector<256x128xf32>
    %64 = arith.subf %58, %63 : vector<256x128xf32>
    %65 = arith.mulf %64, %64 : vector<256x128xf32>
    %cst_46 = arith.constant dense<0.000000e+00> : vector<128xf32>
    %66 = vector.multi_reduction <add>, %65, %cst_46 [0] : vector<256x128xf32> to vector<128xf32>
    %67 = vector.shape_cast %66 : vector<128xf32> to vector<1x128xf32>
    %68 = tpu.concatenate %60, %67 in 0 : vector<1x128xf32>, vector<1x128xf32> -> vector<2x128xf32>
    %69 = vector.shape_cast %68 : vector<2x128xf32> to vector<1x1x2x128xf32>
    %c0_47 = arith.constant 0 : index
    %c0_48 = arith.constant 0 : index
    %c0_49 = arith.constant 0 : index
    %c0_50 = arith.constant 0 : index
    %70 = vector.load %arg4[%c0_47, %c0_48, %c0_49, %c0_50] : memref<1x1x2x128xf32, #tpu.memory_space<vmem>>, vector<1x1x2x128xf32>
    tpu.vector_store %arg4[%c0_47, %c0_48, %c0_49, %c0_50], %69 {strides = array<i32>} : memref<1x1x2x128xf32, #tpu.memory_space<vmem>>, vector<1x1x2x128xf32>,
    return
  }
  func.func @transform_0(%arg0: i32, %arg1: i32) -> (i32, i32, i32, i32) {
    %c0_i32 = arith.constant 0 : i32
    %c0_i32_0 = arith.constant 0 : i32
    %c0_i32_1 = arith.constant 0 : i32
    %c0_i32_2 = arith.constant 0 : i32
    return %arg0, %c0_i32, %c0_i32_0, %c0_i32_1 : i32, i32, i32, i32
  }
  func.func @transform_1(%arg0: i32, %arg1: i32) -> (i32, i32) {
    %c0_i32 = arith.constant 0 : i32
    %c0_i32_0 = arith.constant 0 : i32
    %c0_i32_1 = arith.constant 0 : i32
    return %c0_i32, %c0_i32_0 : i32, i32
  }
  func.func @transform_2(%arg0: i32, %arg1: i32) -> (i32, i32, i32, i32) {
    %c0_i32 = arith.constant 0 : i32
    %c0_i32_0 = arith.constant 0 : i32
    %c0_i32_1 = arith.constant 0 : i32
    return %arg0, %arg1, %c0_i32, %c0_i32_0 : i32, i32, i32, i32
  }
}

</mosaic_0001>

<llo_original>
// kernel: tpu_custom_call.1
$region0: #{tpu_custom_call.1}
  #allocation0 [shape = 'u32[]', space=smem, size = 0x4, offset = 0x4, fixed_abs, tag = 'smem constant byte address 0x4 - core index']
  #allocation1 [shape = 'u32[144,128]{1,0:T(1,128)}', space=vmem, size = 0x12000, scoped, tag = 'internal scratch']
  #allocation2 [shape = 'f32[256,36]{1,0:T(8,128)}', space=vmem, size = 0x20000, scoped, tag = 'scratch operand']
  %s0 = inlined_call_operand.hbm [shape: f32[2,18,18,4], index: 0, kind: input, shape index: {}]
  %s1 = inlined_call_operand.hbm [shape: f32[36,128], index: 1, kind: input, shape index: {}]
  %s2 = inlined_call_operand.hbm [shape: f32[2,1,2,128], index: 2, kind: output, shape index: {}]
  %s3 = sld [smem:[#allocation0]]
  $region49: #{tpu_custom_call.1} parent=0
    _
  %s5 = ssub.s32 1, %s3
  %s6 = scalar_select 0, %s5, %s3
  $region1: #{tpu_custom_call.1} parent=0
    #allocation3 [shape = 'u8[442368]{0}', space=vmem, size = 0x6c000, scoped, tag = 'input window, operand 0']
    #allocation4 [shape = 's32[2]{0}', space=sflag, size = 0x8, scoped, tag = 'scoped memory for tpu_custom_call.1']
    #allocation5 [shape = 's32[2]{0}', space=sflag, size = 0x8, scoped, tag = 'scoped memory for tpu_custom_call.1']
    #allocation6 [shape = 'u8[20480]{0}', space=vmem, size = 0x5000, scoped, tag = 'input window, operand 1, single buffered']
    #allocation7 [shape = 's32[1]{0}', space=sflag, size = 0x4, scoped, tag = 'scoped memory for tpu_custom_call.1']
    #allocation8 [shape = 'u8[2048]{0}', space=vmem, size = 0x800, scoped, tag = 'output window, operand 0']
    %7 = vsyncpa [#allocation4], 0
    %s8 = scalar_lea.sflag [#allocation4], 1
    %9 = vsyncpa %s8, 0
    %10 = vsyncpa [#allocation7], 0
    %11 = vsyncpa [#allocation5], 0
    %s12 = scalar_lea.sflag [#allocation5], 1
    %13 = vsyncpa %s12, 0
    loop: start=0, step=1, limit=4
    $region2: #{tpu_custom_call.1} parent=1 // loop_pre_header
      _
    $region3: #{tpu_custom_call.1} parent=1 // loop_header
      %s15 = sphi 0, %s19
      %p16 = scmp.ge.s32.totalorder %s15, 4
      %s22 = sphi 0, %s34
      %s23 = sphi 0, %s30
      %s24 = sphi 0, %s22
      %s25 = sphi 0, %s23
      %s26 = sphi 0, %s24
      %s27 = sphi 0, %s25
      %s37 = sphi 0, %s39
      %s40 = sphi 0, %s37
      %s41 = sphi 0, %s40
      %s57 = sphi 0, %s41
      %s61 = sphi 0, %s61
      %s63 = sphi 0, %s61
      %s64 = sphi 0, %s63
      %s78 = sphi 0, %s64
      %s86 = sphi 0, %s88
      %s89 = sphi 0, %s86
      %s90 = sphi 0, %s89
      %s106 = sphi 0, %s90
    $region4: #{tpu_custom_call.1} parent=1 // loop_header_branch
      %18 = sbr.rel (%p16) target = $region8
    $region5: #{tpu_custom_call.1} parent=1 // loop_body
      %s20 = ssub.s32 %s15, 1
      %s21 = ssub.s32 %s15, 2
      %s28 = sadd.s32 1, %s23
      %p29 = scmp.ge.s32.totalorder %s28, 1
      %s30 = scalar_select %p29, 0, %s28
      %s31 = sadd.s32 1, %s22
      %s32 = scalar_select %p29, %s31, %s22
      %p33 = scmp.ge.s32.totalorder %s32, 2
      %s34 = scalar_select %p33, 0, %s32
      %s35 = ssub.s32 %s22, %s34
      %p36 = scmp.eq.s32.totalorder %s35, 0
      %s38 = sadd.s32 %s37, 1
      %s39 = scalar_select %p36, %s37, %s38
      %p42 = pneg %p36
      %p43 = scmp.eq.s32.totalorder %s15, 1
      %p44 = por %p42, %p43
      %p45 = scmp.ne.s32.totalorder %s37, %s40
      %p46 = scmp.eq.s32.totalorder %s15, 0
      %p47 = por %p45, %p46
      %p48 = scmp.ne.s32.totalorder %s37, %s40
      %p49 = scmp.eq.s32.totalorder %s20, 1
      %p50 = por %p48, %p49
      %p51 = scmp.ne.s32.totalorder %s40, %s41
      %p52 = scmp.eq.s32.totalorder %s20, 0
      %p53 = por %p51, %p52
      %p54 = scmp.ne.s32.totalorder %s40, %s41
      %p55 = scmp.eq.s32.totalorder %s21, 1
      %p56 = por %p54, %p55
      %p58 = scmp.ne.s32.totalorder %s41, %s57
      %p59 = scmp.eq.s32.totalorder %s21, 0
      %p60 = por %p58, %p59
      %s62 = sadd.s32 %s61, 1
      %p65 = scmp.eq.s32.totalorder %s15, 1
      %p66 = scmp.ne.s32.totalorder %s61, %s63
      %p67 = scmp.eq.s32.totalorder %s15, 0
      %p68 = por %p66, %p67
      %p69 = scmp.ne.s32.totalorder %s61, %s63
      %p70 = scmp.eq.s32.totalorder %s20, 1
      %p71 = por %p69, %p70
      %p72 = scmp.ne.s32.totalorder %s63, %s64
      %p73 = scmp.eq.s32.totalorder %s20, 0
      %p74 = por %p72, %p73
      %p75 = scmp.ne.s32.totalorder %s63, %s64
      %p76 = scmp.eq.s32.totalorder %s21, 1
      %p77 = por %p75, %p76
      %p79 = scmp.ne.s32.totalorder %s64, %s78
      %p80 = scmp.eq.s32.totalorder %s21, 0
      %p81 = por %p79, %p80
      %s82 = ssub.s32 %s22, %s34
      %s83 = ssub.s32 %s23, %s30
      %s84 = sor.u32 %s82, %s83
      %p85 = scmp.eq.s32.totalorder %s84, 0
      %s87 = sadd.s32 %s86, 1
      %s88 = scalar_select %p85, %s86, %s87
      %p91 = pneg %p85
      %p92 = scmp.eq.s32.totalorder %s15, 1
      %p93 = por %p91, %p92
      %p94 = scmp.ne.s32.totalorder %s86, %s89
      %p95 = scmp.eq.s32.totalorder %s15, 0
      %p96 = por %p94, %p95
      %p97 = scmp.ne.s32.totalorder %s86, %s89
      %p98 = scmp.eq.s32.totalorder %s20, 1
      %p99 = por %p97, %p98
      %p100 = scmp.ne.s32.totalorder %s89, %s90
      %p101 = scmp.eq.s32.totalorder %s20, 0
      %p102 = por %p100, %p101
      %p103 = scmp.ne.s32.totalorder %s89, %s90
      %p104 = scmp.eq.s32.totalorder %s21, 1
      %p105 = por %p103, %p104
      %p107 = scmp.ne.s32.totalorder %s90, %s106
      %p108 = scmp.eq.s32.totalorder %s21, 0
      %p109 = por %p107, %p108
      %p110 = scmp.le.s32.totalorder 1, %s15
      %p111 = scmp.lt.s32.totalorder %s15, 3
      %p112 = pnand %p110, %p111
      %p113 = pneg %p112
      // Predicated region
      $region9: #{tpu_custom_call.1} parent=5 // pred_check
        _
      $region10: #{tpu_custom_call.1} parent=5 // pred_check_branch
        %115 = sbr.rel (%p112) target = $region12
      $region11: #{tpu_custom_call.1} parent=5 // pred_region
        %s116 = ssub.s32 %s15, 1
        // Predicated region
        $region13: #{tpu_custom_call.1} parent=11 // pred_check
          %p117 = pneg %p74
        $region14: #{tpu_custom_call.1} parent=11 // pred_check_branch
          %119 = sbr.rel (%p117) target = $region16
        $region15: #{tpu_custom_call.1} parent=11 // pred_region
          %s121 = ssub.s32 640, 640
          %122 = vsyncadd [#allocation7], %s121
          %s123 = sshll.u32 [#allocation6], 4
          %s124 = int_to_ptr.vmem [resolvable:$true] %s123
          %129 = dma.hbm_to_vmem [thread:$0]  %s1, 640, %s124, [#allocation7], 128, 128, 8
        $region16: #{tpu_custom_call.1} parent=11 // pred_fallthru
          _
      $region12: #{tpu_custom_call.1} parent=5 // pred_fallthru
        _
      %p130 = scmp.lt.s32.totalorder %s15, 2
      // Predicated region
      $region17: #{tpu_custom_call.1} parent=5 // pred_check
        %p131 = pneg %p130
      $region18: #{tpu_custom_call.1} parent=5 // pred_check_branch
        %133 = sbr.rel (%p131) target = $region20
      $region19: #{tpu_custom_call.1} parent=5 // pred_region
        // Predicated region
        $region21: #{tpu_custom_call.1} parent=19 // pred_check
          %p134 = pneg %p47
        $region22: #{tpu_custom_call.1} parent=19 // pred_check_branch
          %136 = sbr.rel (%p134) target = $region24
        $region23: #{tpu_custom_call.1} parent=19 // pred_region
          %s137 = sand.u32 %s37, 1
          %s138 = scalar_lea.sflag [#allocation4], %s137
          %s139 = sand.u32 %s37, 1
          %s140 = smul.addr %s139, 432
          %s141 = scalar_lea.vmem [#allocation3], %s140
          %s143 = ssub.s32 6912, 6912
          %144 = vsyncadd %s138, %s143
          %s145 = smul.addr %s22, 54
          %s146 = smul.addr %s145, 128
          %s147 = scalar_lea.hbm %s0, %s146
          %s148 = sshll.u32 %s141, 4
          %s149 = int_to_ptr.vmem [resolvable:$true] %s148
          %154 = dma.hbm_to_vmem [thread:$0]  %s147, 6912, %s149, %s138, 128, 128, 8
        $region24: #{tpu_custom_call.1} parent=19 // pred_fallthru
          _
      $region20: #{tpu_custom_call.1} parent=5 // pred_fallthru
        _
      %p155 = scmp.le.s32.totalorder 1, %s15
      %p156 = scmp.lt.s32.totalorder %s15, 3
      %p157 = pnand %p155, %p156
      %p158 = pneg %p157
      // Predicated region
      $region25: #{tpu_custom_call.1} parent=5 // pred_check
        _
      $region26: #{tpu_custom_call.1} parent=5 // pred_check_branch
        %160 = sbr.rel (%p157) target = $region28
      $region27: #{tpu_custom_call.1} parent=5 // pred_region
        %s161 = ssub.s32 %s15, 1
        %s162 = sand.u32 %s40, 1
        %s163 = scalar_lea.sflag [#allocation4], %s162
        %s164 = sand.u32 %s40, 1
        %s165 = smul.addr %s164, 432
        %s166 = scalar_lea.vmem [#allocation3], %s165
        // Predicated region
        $region29: #{tpu_custom_call.1} parent=27 // pred_check
          %p167 = pneg %p53
        $region30: #{tpu_custom_call.1} parent=27 // pred_check_branch
          %169 = sbr.rel (%p167) target = $region32
        $region31: #{tpu_custom_call.1} parent=27 // pred_region
          %170 = dma.done %s163, 6912
        $region32: #{tpu_custom_call.1} parent=27 // pred_fallthru
          _
        // Predicated region
        $region33: #{tpu_custom_call.1} parent=27 // pred_check
          %p171 = pneg %p74
        $region34: #{tpu_custom_call.1} parent=27 // pred_check_branch
          %173 = sbr.rel (%p171) target = $region36
        $region35: #{tpu_custom_call.1} parent=27 // pred_region
          %174 = dma.done [#allocation7], 640
        $region36: #{tpu_custom_call.1} parent=27 // pred_fallthru
          _
        %s175 = sand.u32 %s40, 1
        %s176 = scalar_lea.sflag [#allocation4], %s175
        %s177 = sand.u32 %s40, 1
        %s178 = smul.addr %s177, 432
        %s179 = scalar_lea.vmem [#allocation3], %s178
        %p180 = pneg %p53
        %p181 = pneg %p50
        %p182 = pneg %p74
        %p183 = pneg %p71
        %p184 = pneg %p102
        %p185 = pneg %p99
        %s186 = sand.u32 %s89, 1
        %s187 = scalar_lea.sflag [#allocation5], %s186
        %s188 = sand.u32 %s89, 1
        %s189 = smul.addr %s188, 2
        %s190 = scalar_lea.vmem [#allocation8], %s189
        %s191 = smul.u32 %s25, 16
        %s192 = smul.u32 %s191, 24
        %s193 = scalar_lea.vmem %s166, %s192 [#allocation3]
        %v194 = vld [vmem:[%s193] sm:$0xff]
        %v195 = vld [vmem:[%s193 + $0x8] sm:$0xff]
        %v196 = vld [vmem:[%s193 + $0x18] sm:$0xff]
        %v197 = vld [vmem:[%s193 + $0x20] sm:$0xff]
        %v198 = vld [vmem:[%s193 + $0x30] sm:$0xff]
        %v199 = vld [vmem:[%s193 + $0x38] sm:$0xff]
        %v200 = vld [vmem:[%s193 + $0x48] sm:$0xff]
        %v201 = vld [vmem:[%s193 + $0x50] sm:$0xff]
        %v202 = vld [vmem:[%s193 + $0x60] sm:$0xff]
        %v203 = vld [vmem:[%s193 + $0x68] sm:$0xff]
        %v204 = vld [vmem:[%s193 + $0x78] sm:$0xff]
        %v205 = vld [vmem:[%s193 + $0x80] sm:$0xff]
        %v206 = vld [vmem:[%s193 + $0x90] sm:$0xff]
        %v207 = vld [vmem:[%s193 + $0x98] sm:$0xff]
        %v208 = vld [vmem:[%s193 + $0xa8] sm:$0xff]
        %v209 = vld [vmem:[%s193 + $0xb0] sm:$0xff]
        %v210 = vld [vmem:[%s193 + $0xc0] sm:$0xff]
        %v211 = vld [vmem:[%s193 + $0xc8] sm:$0xff]
        %v212 = vld [vmem:[%s193 + $0xd8] sm:$0xff]
        %v213 = vld [vmem:[%s193 + $0xe0] sm:$0xff]
        %v214 = vld [vmem:[%s193 + $0xf0] sm:$0xff]
        %v215 = vld [vmem:[%s193 + $0xf8] sm:$0xff]
        %v216 = vld [vmem:[%s193 + $0x108] sm:$0xff]
        %v217 = vld [vmem:[%s193 + $0x110] sm:$0xff]
        %v218 = vld [vmem:[%s193 + $0x120] sm:$0xff]
        %v219 = vld [vmem:[%s193 + $0x128] sm:$0xff]
        %v220 = vld [vmem:[%s193 + $0x138] sm:$0xff]
        %v221 = vld [vmem:[%s193 + $0x140] sm:$0xff]
        %v222 = vld [vmem:[%s193 + $0x150] sm:$0xff]
        %v223 = vld [vmem:[%s193 + $0x158] sm:$0xff]
        %v224 = vld [vmem:[%s193 + $0x168] sm:$0xff]
        %v225 = vld [vmem:[%s193 + $0x170] sm:$0xff]
        %vm226 = vcmask 31744
        %227 = vst.msk [vmem:[#allocation2] sm:$0xff] %vm226, %v194
        %228 = vst.msk [vmem:[#allocation2 + $0x8] sm:$0xff] %vm226, %v195
        %229 = vst.msk [vmem:[#allocation2 + $0x10] sm:$0xff] %vm226, %v196
        %230 = vst.msk [vmem:[#allocation2 + $0x18] sm:$0xff] %vm226, %v197
        %231 = vst.msk [vmem:[#allocation2 + $0x20] sm:$0xff] %vm226, %v198
        %232 = vst.msk [vmem:[#allocation2 + $0x28] sm:$0xff] %vm226, %v199
        %233 = vst.msk [vmem:[#allocation2 + $0x30] sm:$0xff] %vm226, %v200
        %234 = vst.msk [vmem:[#allocation2 + $0x38] sm:$0xff] %vm226, %v201
        %235 = vst.msk [vmem:[#allocation2 + $0x40] sm:$0xff] %vm226, %v202
        %236 = vst.msk [vmem:[#allocation2 + $0x48] sm:$0xff] %vm226, %v203
        %237 = vst.msk [vmem:[#allocation2 + $0x50] sm:$0xff] %vm226, %v204
        %238 = vst.msk [vmem:[#allocation2 + $0x58] sm:$0xff] %vm226, %v205
        %239 = vst.msk [vmem:[#allocation2 + $0x60] sm:$0xff] %vm226, %v206
        %240 = vst.msk [vmem:[#allocation2 + $0x68] sm:$0xff] %vm226, %v207
        %241 = vst.msk [vmem:[#allocation2 + $0x70] sm:$0xff] %vm226, %v208
        %242 = vst.msk [vmem:[#allocation2 + $0x78] sm:$0xff] %vm226, %v209
        %243 = vst.msk [vmem:[#allocation2 + $0x80] sm:$0xff] %vm226, %v210
        %244 = vst.msk [vmem:[#allocation2 + $0x88] sm:$0xff] %vm226, %v211
        %245 = vst.msk [vmem:[#allocation2 + $0x90] sm:$0xff] %vm226, %v212
        %246 = vst.msk [vmem:[#allocation2 + $0x98] sm:$0xff] %vm226, %v213
        %247 = vst.msk [vmem:[#allocation2 + $0xa0] sm:$0xff] %vm226, %v214
        %248 = vst.msk [vmem:[#allocation2 + $0xa8] sm:$0xff] %vm226, %v215
        %249 = vst.msk [vmem:[#allocation2 + $0xb0] sm:$0xff] %vm226, %v216
        %250 = vst.msk [vmem:[#allocation2 + $0xb8] sm:$0xff] %vm226, %v217
        %251 = vst.msk [vmem:[#allocation2 + $0xc0] sm:$0xff] %vm226, %v218
        %252 = vst.msk [vmem:[#allocation2 + $0xc8] sm:$0xff] %vm226, %v219
        %253 = vst.msk [vmem:[#allocation2 + $0xd0] sm:$0xff] %vm226, %v220
        %254 = vst.msk [vmem:[#allocation2 + $0xd8] sm:$0xff] %vm226, %v221
        %255 = vst.msk [vmem:[#allocation2 + $0xe0] sm:$0xff] %vm226, %v222
        %256 = vst.msk [vmem:[#allocation2 + $0xe8] sm:$0xff] %vm226, %v223
        %257 = vst.msk [vmem:[#allocation2 + $0xf0] sm:$0xff] %vm226, %v224
        %258 = vst.msk [vmem:[#allocation2 + $0xf8] sm:$0xff] %vm226, %v225
        %v259 = vld [vmem:[%s193 + $0x1] sm:$0xff]
        %v260 = vld [vmem:[%s193 + $0x9] sm:$0xff]
        %v261 = vld [vmem:[%s193 + $0x19] sm:$0xff]
        %v262 = vld [vmem:[%s193 + $0x21] sm:$0xff]
        %v263 = vld [vmem:[%s193 + $0x31] sm:$0xff]
        %v264 = vld [vmem:[%s193 + $0x39] sm:$0xff]
        %v265 = vld [vmem:[%s193 + $0x49] sm:$0xff]
        %v266 = vld [vmem:[%s193 + $0x51] sm:$0xff]
        %v267 = vld [vmem:[%s193 + $0x61] sm:$0xff]
        %v268 = vld [vmem:[%s193 + $0x69] sm:$0xff]
        %v269 = vld [vmem:[%s193 + $0x79] sm:$0xff]
        %v270 = vld [vmem:[%s193 + $0x81] sm:$0xff]
        %v271 = vld [vmem:[%s193 + $0x91] sm:$0xff]
        %v272 = vld [vmem:[%s193 + $0x99] sm:$0xff]
        %v273 = vld [vmem:[%s193 + $0xa9] sm:$0xff]
        %v274 = vld [vmem:[%s193 + $0xb1] sm:$0xff]
        %v275 = vld [vmem:[%s193 + $0xc1] sm:$0xff]
        %v276 = vld [vmem:[%s193 + $0xc9] sm:$0xff]
        %v277 = vld [vmem:[%s193 + $0xd9] sm:$0xff]
        %v278 = vld [vmem:[%s193 + $0xe1] sm:$0xff]
        %v279 = vld [vmem:[%s193 + $0xf1] sm:$0xff]
        %v280 = vld [vmem:[%s193 + $0xf9] sm:$0xff]
        %v281 = vld [vmem:[%s193 + $0x109] sm:$0xff]
        %v282 = vld [vmem:[%s193 + $0x111] sm:$0xff]
        %v283 = vld [vmem:[%s193 + $0x121] sm:$0xff]
        %v284 = vld [vmem:[%s193 + $0x129] sm:$0xff]
        %v285 = vld [vmem:[%s193 + $0x139] sm:$0xff]
        %v286 = vld [vmem:[%s193 + $0x141] sm:$0xff]
        %v287 = vld [vmem:[%s193 + $0x151] sm:$0xff]
        %v288 = vld [vmem:[%s193 + $0x159] sm:$0xff]
        %v289 = vld [vmem:[%s193 + $0x169] sm:$0xff]
        %v290 = vld [vmem:[%s193 + $0x171] sm:$0xff]
        %323 = vrot.lane.b32.xlu0 %v259, 4
        %v324 = vpop.permute.xlu0 %323
        %325 = vrot.lane.b32.xlu0 %v260, 4
        %v326 = vpop.permute.xlu0 %325
        %327 = vrot.lane.b32.xlu0 %v261, 4
        %v328 = vpop.permute.xlu0 %327
        %329 = vrot.lane.b32.xlu0 %v262, 4
        %v330 = vpop.permute.xlu0 %329
        %331 = vrot.lane.b32.xlu0 %v263, 4
        %v332 = vpop.permute.xlu0 %331
        %333 = vrot.lane.b32.xlu0 %v264, 4
        %v334 = vpop.permute.xlu0 %333
        %335 = vrot.lane.b32.xlu0 %v265, 4
        %v336 = vpop.permute.xlu0 %335
        %337 = vrot.lane.b32.xlu0 %v266, 4
        %v338 = vpop.permute.xlu0 %337
        %339 = vrot.lane.b32.xlu0 %v267, 4
        %v340 = vpop.permute.xlu0 %339
        %341 = vrot.lane.b32.xlu0 %v268, 4
        %v342 = vpop.permute.xlu0 %341
        %343 = vrot.lane.b32.xlu0 %v269, 4
        %v344 = vpop.permute.xlu0 %343
        %345 = vrot.lane.b32.xlu0 %v270, 4
        %v346 = vpop.permute.xlu0 %345
        %347 = vrot.lane.b32.xlu0 %v271, 4
        %v348 = vpop.permute.xlu0 %347
        %349 = vrot.lane.b32.xlu0 %v272, 4
        %v350 = vpop.permute.xlu0 %349
        %351 = vrot.lane.b32.xlu0 %v273, 4
        %v352 = vpop.permute.xlu0 %351
        %353 = vrot.lane.b32.xlu0 %v274, 4
        %v354 = vpop.permute.xlu0 %353
        %355 = vrot.lane.b32.xlu0 %v275, 4
        %v356 = vpop.permute.xlu0 %355
        %357 = vrot.lane.b32.xlu0 %v276, 4
        %v358 = vpop.permute.xlu0 %357
        %359 = vrot.lane.b32.xlu0 %v277, 4
        %v360 = vpop.permute.xlu0 %359
        %361 = vrot.lane.b32.xlu0 %v278, 4
        %v362 = vpop.permute.xlu0 %361
        %363 = vrot.lane.b32.xlu0 %v279, 4
        %v364 = vpop.permute.xlu0 %363
        %365 = vrot.lane.b32.xlu0 %v280, 4
        %v366 = vpop.permute.xlu0 %365
        %367 = vrot.lane.b32.xlu0 %v281, 4
        %v368 = vpop.permute.xlu0 %367
        %369 = vrot.lane.b32.xlu0 %v282, 4
        %v370 = vpop.permute.xlu0 %369
        %371 = vrot.lane.b32.xlu0 %v283, 4
        %v372 = vpop.permute.xlu0 %371
        %373 = vrot.lane.b32.xlu0 %v284, 4
        %v374 = vpop.permute.xlu0 %373
        %375 = vrot.lane.b32.xlu0 %v285, 4
        %v376 = vpop.permute.xlu0 %375
        %377 = vrot.lane.b32.xlu0 %v286, 4
        %v378 = vpop.permute.xlu0 %377
        %379 = vrot.lane.b32.xlu0 %v287, 4
        %v380 = vpop.permute.xlu0 %379
        %381 = vrot.lane.b32.xlu0 %v288, 4
        %v382 = vpop.permute.xlu0 %381
        %383 = vrot.lane.b32.xlu0 %v289, 4
        %v384 = vpop.permute.xlu0 %383
        %385 = vrot.lane.b32.xlu0 %v290, 4
        %v386 = vpop.permute.xlu0 %385
        %vm419 = vcmask 64544
        %420 = vst.msk [vmem:[#allocation2] sm:$0xff] %vm419, %v324
        %421 = vst.msk [vmem:[#allocation2 + $0x8] sm:$0xff] %vm419, %v326
        %422 = vst.msk [vmem:[#allocation2 + $0x10] sm:$0xff] %vm419, %v328
        %423 = vst.msk [vmem:[#allocation2 + $0x18] sm:$0xff] %vm419, %v330
        %424 = vst.msk [vmem:[#allocation2 + $0x20] sm:$0xff] %vm419, %v332
        %425 = vst.msk [vmem:[#allocation2 + $0x28] sm:$0xff] %vm419, %v334
        %426 = vst.msk [vmem:[#allocation2 + $0x30] sm:$0xff] %vm419, %v336
        %427 = vst.msk [vmem:[#allocation2 + $0x38] sm:$0xff] %vm419, %v338
        %428 = vst.msk [vmem:[#allocation2 + $0x40] sm:$0xff] %vm419, %v340
        %429 = vst.msk [vmem:[#allocation2 + $0x48] sm:$0xff] %vm419, %v342
        %430 = vst.msk [vmem:[#allocation2 + $0x50] sm:$0xff] %vm419, %v344
        %431 = vst.msk [vmem:[#allocation2 + $0x58] sm:$0xff] %vm419, %v346
        %432 = vst.msk [vmem:[#allocation2 + $0x60] sm:$0xff] %vm419, %v348
        %433 = vst.msk [vmem:[#allocation2 + $0x68] sm:$0xff] %vm419, %v350
        %434 = vst.msk [vmem:[#allocation2 + $0x70] sm:$0xff] %vm419, %v352
        %435 = vst.msk [vmem:[#allocation2 + $0x78] sm:$0xff] %vm419, %v354
        %436 = vst.msk [vmem:[#allocation2 + $0x80] sm:$0xff] %vm419, %v356
        %437 = vst.msk [vmem:[#allocation2 + $0x88] sm:$0xff] %vm419, %v358
        %438 = vst.msk [vmem:[#allocation2 + $0x90] sm:$0xff] %vm419, %v360
        %439 = vst.msk [vmem:[#allocation2 + $0x98] sm:$0xff] %vm419, %v362
        %440 = vst.msk [vmem:[#allocation2 + $0xa0] sm:$0xff] %vm419, %v364
        %441 = vst.msk [vmem:[#allocation2 + $0xa8] sm:$0xff] %vm419, %v366
        %442 = vst.msk [vmem:[#allocation2 + $0xb0] sm:$0xff] %vm419, %v368
        %443 = vst.msk [vmem:[#allocation2 + $0xb8] sm:$0xff] %vm419, %v370
        %444 = vst.msk [vmem:[#allocation2 + $0xc0] sm:$0xff] %vm419, %v372
        %445 = vst.msk [vmem:[#allocation2 + $0xc8] sm:$0xff] %vm419, %v374
        %446 = vst.msk [vmem:[#allocation2 + $0xd0] sm:$0xff] %vm419, %v376
        %447 = vst.msk [vmem:[#allocation2 + $0xd8] sm:$0xff] %vm419, %v378
        %448 = vst.msk [vmem:[#allocation2 + $0xe0] sm:$0xff] %vm419, %v380
        %449 = vst.msk [vmem:[#allocation2 + $0xe8] sm:$0xff] %vm419, %v382
        %450 = vst.msk [vmem:[#allocation2 + $0xf0] sm:$0xff] %vm419, %v384
        %451 = vst.msk [vmem:[#allocation2 + $0xf8] sm:$0xff] %vm419, %v386
        %v452 = vld [vmem:[%s193 + $0x2] sm:$0xff]
        %v453 = vld [vmem:[%s193 + $0xa] sm:$0xff]
        %v454 = vld [vmem:[%s193 + $0x1a] sm:$0xff]
        %v455 = vld [vmem:[%s193 + $0x22] sm:$0xff]
        %v456 = vld [vmem:[%s193 + $0x32] sm:$0xff]
        %v457 = vld [vmem:[%s193 + $0x3a] sm:$0xff]
        %v458 = vld [vmem:[%s193 + $0x4a] sm:$0xff]
        %v459 = vld [vmem:[%s193 + $0x52] sm:$0xff]
        %v460 = vld [vmem:[%s193 + $0x62] sm:$0xff]
        %v461 = vld [vmem:[%s193 + $0x6a] sm:$0xff]
        %v462 = vld [vmem:[%s193 + $0x7a] sm:$0xff]
        %v463 = vld [vmem:[%s193 + $0x82] sm:$0xff]
        %v464 = vld [vmem:[%s193 + $0x92] sm:$0xff]
        %v465 = vld [vmem:[%s193 + $0x9a] sm:$0xff]
        %v466 = vld [vmem:[%s193 + $0xaa] sm:$0xff]
        %v467 = vld [vmem:[%s193 + $0xb2] sm:$0xff]
        %v468 = vld [vmem:[%s193 + $0xc2] sm:$0xff]
        %v469 = vld [vmem:[%s193 + $0xca] sm:$0xff]
        %v470 = vld [vmem:[%s193 + $0xda] sm:$0xff]
        %v471 = vld [vmem:[%s193 + $0xe2] sm:$0xff]
        %v472 = vld [vmem:[%s193 + $0xf2] sm:$0xff]
        %v473 = vld [vmem:[%s193 + $0xfa] sm:$0xff]
        %v474 = vld [vmem:[%s193 + $0x10a] sm:$0xff]
        %v475 = vld [vmem:[%s193 + $0x112] sm:$0xff]
        %v476 = vld [vmem:[%s193 + $0x122] sm:$0xff]
        %v477 = vld [vmem:[%s193 + $0x12a] sm:$0xff]
        %v478 = vld [vmem:[%s193 + $0x13a] sm:$0xff]
        %v479 = vld [vmem:[%s193 + $0x142] sm:$0xff]
        %v480 = vld [vmem:[%s193 + $0x152] sm:$0xff]
        %v481 = vld [vmem:[%s193 + $0x15a] sm:$0xff]
        %v482 = vld [vmem:[%s193 + $0x16a] sm:$0xff]
        %v483 = vld [vmem:[%s193 + $0x172] sm:$0xff]
        %516 = vrot.lane.b32.xlu0 %v452, 8
        %v517 = vpop.permute.xlu0 %516
        %518 = vrot.lane.b32.xlu0 %v453, 8
        %v519 = vpop.permute.xlu0 %518
        %520 = vrot.lane.b32.xlu0 %v454, 8
        %v521 = vpop.permute.xlu0 %520
        %522 = vrot.lane.b32.xlu0 %v455, 8
        %v523 = vpop.permute.xlu0 %522
        %524 = vrot.lane.b32.xlu0 %v456, 8
        %v525 = vpop.permute.xlu0 %524
        %526 = vrot.lane.b32.xlu0 %v457, 8
        %v527 = vpop.permute.xlu0 %526
        %528 = vrot.lane.b32.xlu0 %v458, 8
        %v529 = vpop.permute.xlu0 %528
        %530 = vrot.lane.b32.xlu0 %v459, 8
        %v531 = vpop.permute.xlu0 %530
        %532 = vrot.lane.b32.xlu0 %v460, 8
        %v533 = vpop.permute.xlu0 %532
        %534 = vrot.lane.b32.xlu0 %v461, 8
        %v535 = vpop.permute.xlu0 %534
        %536 = vrot.lane.b32.xlu0 %v462, 8
        %v537 = vpop.permute.xlu0 %536
        %538 = vrot.lane.b32.xlu0 %v463, 8
        %v539 = vpop.permute.xlu0 %538
        %540 = vrot.lane.b32.xlu0 %v464, 8
        %v541 = vpop.permute.xlu0 %540
        %542 = vrot.lane.b32.xlu0 %v465, 8
        %v543 = vpop.permute.xlu0 %542
        %544 = vrot.lane.b32.xlu0 %v466, 8
        %v545 = vpop.permute.xlu0 %544
        %546 = vrot.lane.b32.xlu0 %v467, 8
        %v547 = vpop.permute.xlu0 %546
        %548 = vrot.lane.b32.xlu0 %v468, 8
        %v549 = vpop.permute.xlu0 %548
        %550 = vrot.lane.b32.xlu0 %v469, 8
        %v551 = vpop.permute.xlu0 %550
        %552 = vrot.lane.b32.xlu0 %v470, 8
        %v553 = vpop.permute.xlu0 %552
        %554 = vrot.lane.b32.xlu0 %v471, 8
        %v555 = vpop.permute.xlu0 %554
        %556 = vrot.lane.b32.xlu0 %v472, 8
        %v557 = vpop.permute.xlu0 %556
        %558 = vrot.lane.b32.xlu0 %v473, 8
        %v559 = vpop.permute.xlu0 %558
        %560 = vrot.lane.b32.xlu0 %v474, 8
        %v561 = vpop.permute.xlu0 %560
        %562 = vrot.lane.b32.xlu0 %v475, 8
        %v563 = vpop.permute.xlu0 %562
        %564 = vrot.lane.b32.xlu0 %v476, 8
        %v565 = vpop.permute.xlu0 %564
        %566 = vrot.lane.b32.xlu0 %v477, 8
        %v567 = vpop.permute.xlu0 %566
        %568 = vrot.lane.b32.xlu0 %v478, 8
        %v569 = vpop.permute.xlu0 %568
        %570 = vrot.lane.b32.xlu0 %v479, 8
        %v571 = vpop.permute.xlu0 %570
        %572 = vrot.lane.b32.xlu0 %v480, 8
        %v573 = vpop.permute.xlu0 %572
        %574 = vrot.lane.b32.xlu0 %v481, 8
        %v575 = vpop.permute.xlu0 %574
        %576 = vrot.lane.b32.xlu0 %v482, 8
        %v577 = vpop.permute.xlu0 %576
        %578 = vrot.lane.b32.xlu0 %v483, 8
        %v579 = vpop.permute.xlu0 %578
        %vm612 = vcmask 97344
        %613 = vst.msk [vmem:[#allocation2] sm:$0xff] %vm612, %v517
        %614 = vst.msk [vmem:[#allocation2 + $0x8] sm:$0xff] %vm612, %v519
        %615 = vst.msk [vmem:[#allocation2 + $0x10] sm:$0xff] %vm612, %v521
        %616 = vst.msk [vmem:[#allocation2 + $0x18] sm:$0xff] %vm612, %v523
        %617 = vst.msk [vmem:[#allocation2 + $0x20] sm:$0xff] %vm612, %v525
        %618 = vst.msk [vmem:[#allocation2 + $0x28] sm:$0xff] %vm612, %v527
        %619 = vst.msk [vmem:[#allocation2 + $0x30] sm:$0xff] %vm612, %v529
        %620 = vst.msk [vmem:[#allocation2 + $0x38] sm:$0xff] %vm612, %v531
        %621 = vst.msk [vmem:[#allocation2 + $0x40] sm:$0xff] %vm612, %v533
        %622 = vst.msk [vmem:[#allocation2 + $0x48] sm:$0xff] %vm612, %v535
        %623 = vst.msk [vmem:[#allocation2 + $0x50] sm:$0xff] %vm612, %v537
        %624 = vst.msk [vmem:[#allocation2 + $0x58] sm:$0xff] %vm612, %v539
        %625 = vst.msk [vmem:[#allocation2 + $0x60] sm:$0xff] %vm612, %v541
        %626 = vst.msk [vmem:[#allocation2 + $0x68] sm:$0xff] %vm612, %v543
        %627 = vst.msk [vmem:[#allocation2 + $0x70] sm:$0xff] %vm612, %v545
        %628 = vst.msk [vmem:[#allocation2 + $0x78] sm:$0xff] %vm612, %v547
        %629 = vst.msk [vmem:[#allocation2 + $0x80] sm:$0xff] %vm612, %v549
        %630 = vst.msk [vmem:[#allocation2 + $0x88] sm:$0xff] %vm612, %v551
        %631 = vst.msk [vmem:[#allocation2 + $0x90] sm:$0xff] %vm612, %v553
        %632 = vst.msk [vmem:[#allocation2 + $0x98] sm:$0xff] %vm612, %v555
        %633 = vst.msk [vmem:[#allocation2 + $0xa0] sm:$0xff] %vm612, %v557
        %634 = vst.msk [vmem:[#allocation2 + $0xa8] sm:$0xff] %vm612, %v559
        %635 = vst.msk [vmem:[#allocation2 + $0xb0] sm:$0xff] %vm612, %v561
        %636 = vst.msk [vmem:[#allocation2 + $0xb8] sm:$0xff] %vm612, %v563
        %637 = vst.msk [vmem:[#allocation2 + $0xc0] sm:$0xff] %vm612, %v565
        %638 = vst.msk [vmem:[#allocation2 + $0xc8] sm:$0xff] %vm612, %v567
        %639 = vst.msk [vmem:[#allocation2 + $0xd0] sm:$0xff] %vm612, %v569
        %640 = vst.msk [vmem:[#allocation2 + $0xd8] sm:$0xff] %vm612, %v571
        %641 = vst.msk [vmem:[#allocation2 + $0xe0] sm:$0xff] %vm612, %v573
        %642 = vst.msk [vmem:[#allocation2 + $0xe8] sm:$0xff] %vm612, %v575
        %643 = vst.msk [vmem:[#allocation2 + $0xf0] sm:$0xff] %vm612, %v577
        %644 = vst.msk [vmem:[#allocation2 + $0xf8] sm:$0xff] %vm612, %v579
        %s645 = sadd.s32 %s191, 1
        %s646 = smul.u32 %s645, 24
        %s647 = scalar_lea.vmem %s166, %s646 [#allocation3]
        %v648 = vld [vmem:[%s647] sm:$0xff]
        %v649 = vld [vmem:[%s647 + $0x8] sm:$0xff]
        %v650 = vld [vmem:[%s647 + $0x18] sm:$0xff]
        %v651 = vld [vmem:[%s647 + $0x20] sm:$0xff]
        %v652 = vld [vmem:[%s647 + $0x30] sm:$0xff]
        %v653 = vld [vmem:[%s647 + $0x38] sm:$0xff]
        %v654 = vld [vmem:[%s647 + $0x48] sm:$0xff]
        %v655 = vld [vmem:[%s647 + $0x50] sm:$0xff]
        %v656 = vld [vmem:[%s647 + $0x60] sm:$0xff]
        %v657 = vld [vmem:[%s647 + $0x68] sm:$0xff]
        %v658 = vld [vmem:[%s647 + $0x78] sm:$0xff]
        %v659 = vld [vmem:[%s647 + $0x80] sm:$0xff]
        %v660 = vld [vmem:[%s647 + $0x90] sm:$0xff]
        %v661 = vld [vmem:[%s647 + $0x98] sm:$0xff]
        %v662 = vld [vmem:[%s647 + $0xa8] sm:$0xff]
        %v663 = vld [vmem:[%s647 + $0xb0] sm:$0xff]
        %v664 = vld [vmem:[%s647 + $0xc0] sm:$0xff]
        %v665 = vld [vmem:[%s647 + $0xc8] sm:$0xff]
        %v666 = vld [vmem:[%s647 + $0xd8] sm:$0xff]
        %v667 = vld [vmem:[%s647 + $0xe0] sm:$0xff]
        %v668 = vld [vmem:[%s647 + $0xf0] sm:$0xff]
        %v669 = vld [vmem:[%s647 + $0xf8] sm:$0xff]
        %v670 = vld [vmem:[%s647 + $0x108] sm:$0xff]
        %v671 = vld [vmem:[%s647 + $0x110] sm:$0xff]
        %v672 = vld [vmem:[%s647 + $0x120] sm:$0xff]
        %v673 = vld [vmem:[%s647 + $0x128] sm:$0xff]
        %v674 = vld [vmem:[%s647 + $0x138] sm:$0xff]
        %v675 = vld [vmem:[%s647 + $0x140] sm:$0xff]
        %v676 = vld [vmem:[%s647 + $0x150] sm:$0xff]
        %v677 = vld [vmem:[%s647 + $0x158] sm:$0xff]
        %v678 = vld [vmem:[%s647 + $0x168] sm:$0xff]
        %v679 = vld [vmem:[%s647 + $0x170] sm:$0xff]
        %712 = vrot.lane.b32.xlu0 %v648, 12
        %v713 = vpop.permute.xlu0 %712
        %714 = vrot.lane.b32.xlu0 %v649, 12
        %v715 = vpop.permute.xlu0 %714
        %716 = vrot.lane.b32.xlu0 %v650, 12
        %v717 = vpop.permute.xlu0 %716
        %718 = vrot.lane.b32.xlu0 %v651, 12
        %v719 = vpop.permute.xlu0 %718
        %720 = vrot.lane.b32.xlu0 %v652, 12
        %v721 = vpop.permute.xlu0 %720
        %722 = vrot.lane.b32.xlu0 %v653, 12
        %v723 = vpop.permute.xlu0 %722
        %724 = vrot.lane.b32.xlu0 %v654, 12
        %v725 = vpop.permute.xlu0 %724
        %726 = vrot.lane.b32.xlu0 %v655, 12
        %v727 = vpop.permute.xlu0 %726
        %728 = vrot.lane.b32.xlu0 %v656, 12
        %v729 = vpop.permute.xlu0 %728
        %730 = vrot.lane.b32.xlu0 %v657, 12
        %v731 = vpop.permute.xlu0 %730
        %732 = vrot.lane.b32.xlu0 %v658, 12
        %v733 = vpop.permute.xlu0 %732
        %734 = vrot.lane.b32.xlu0 %v659, 12
        %v735 = vpop.permute.xlu0 %734
        %736 = vrot.lane.b32.xlu0 %v660, 12
        %v737 = vpop.permute.xlu0 %736
        %738 = vrot.lane.b32.xlu0 %v661, 12
        %v739 = vpop.permute.xlu0 %738
        %740 = vrot.lane.b32.xlu0 %v662, 12
        %v741 = vpop.permute.xlu0 %740
        %742 = vrot.lane.b32.xlu0 %v663, 12
        %v743 = vpop.permute.xlu0 %742
        %744 = vrot.lane.b32.xlu0 %v664, 12
        %v745 = vpop.permute.xlu0 %744
        %746 = vrot.lane.b32.xlu0 %v665, 12
        %v747 = vpop.permute.xlu0 %746
        %748 = vrot.lane.b32.xlu0 %v666, 12
        %v749 = vpop.permute.xlu0 %748
        %750 = vrot.lane.b32.xlu0 %v667, 12
        %v751 = vpop.permute.xlu0 %750
        %752 = vrot.lane.b32.xlu0 %v668, 12
        %v753 = vpop.permute.xlu0 %752
        %754 = vrot.lane.b32.xlu0 %v669, 12
        %v755 = vpop.permute.xlu0 %754
        %756 = vrot.lane.b32.xlu0 %v670, 12
        %v757 = vpop.permute.xlu0 %756
        %758 = vrot.lane.b32.xlu0 %v671, 12
        %v759 = vpop.permute.xlu0 %758
        %760 = vrot.lane.b32.xlu0 %v672, 12
        %v761 = vpop.permute.xlu0 %760
        %762 = vrot.lane.b32.xlu0 %v673, 12
        %v763 = vpop.permute.xlu0 %762
        %764 = vrot.lane.b32.xlu0 %v674, 12
        %v765 = vpop.permute.xlu0 %764
        %766 = vrot.lane.b32.xlu0 %v675, 12
        %v767 = vpop.permute.xlu0 %766
        %768 = vrot.lane.b32.xlu0 %v676, 12
        %v769 = vpop.permute.xlu0 %768
        %770 = vrot.lane.b32.xlu0 %v677, 12
        %v771 = vpop.permute.xlu0 %770
        %772 = vrot.lane.b32.xlu0 %v678, 12
        %v773 = vpop.permute.xlu0 %772
        %774 = vrot.lane.b32.xlu0 %v679, 12
        %v775 = vpop.permute.xlu0 %774
        %vm808 = vcmask 130144
        %809 = vst.msk [vmem:[#allocation2] sm:$0xff] %vm808, %v713
        %810 = vst.msk [vmem:[#allocation2 + $0x8] sm:$0xff] %vm808, %v715
        %811 = vst.msk [vmem:[#allocation2 + $0x10] sm:$0xff] %vm808, %v717
        %812 = vst.msk [vmem:[#allocation2 + $0x18] sm:$0xff] %vm808, %v719
        %813 = vst.msk [vmem:[#allocation2 + $0x20] sm:$0xff] %vm808, %v721
        %814 = vst.msk [vmem:[#allocation2 + $0x28] sm:$0xff] %vm808, %v723
        %815 = vst.msk [vmem:[#allocation2 + $0x30] sm:$0xff] %vm808, %v725
        %816 = vst.msk [vmem:[#allocation2 + $0x38] sm:$0xff] %vm808, %v727
        %817 = vst.msk [vmem:[#allocation2 + $0x40] sm:$0xff] %vm808, %v729
        %818 = vst.msk [vmem:[#allocation2 + $0x48] sm:$0xff] %vm808, %v731
        %819 = vst.msk [vmem:[#allocation2 + $0x50] sm:$0xff] %vm808, %v733
        %820 = vst.msk [vmem:[#allocation2 + $0x58] sm:$0xff] %vm808, %v735
        %821 = vst.msk [vmem:[#allocation2 + $0x60] sm:$0xff] %vm808, %v737
        %822 = vst.msk [vmem:[#allocation2 + $0x68] sm:$0xff] %vm808, %v739
        %823 = vst.msk [vmem:[#allocation2 + $0x70] sm:$0xff] %vm808, %v741
        %824 = vst.msk [vmem:[#allocation2 + $0x78] sm:$0xff] %vm808, %v743
        %825 = vst.msk [vmem:[#allocation2 + $0x80] sm:$0xff] %vm808, %v745
        %826 = vst.msk [vmem:[#allocation2 + $0x88] sm:$0xff] %vm808, %v747
        %827 = vst.msk [vmem:[#allocation2 + $0x90] sm:$0xff] %vm808, %v749
        %828 = vst.msk [vmem:[#allocation2 + $0x98] sm:$0xff] %vm808, %v751
        %829 = vst.msk [vmem:[#allocation2 + $0xa0] sm:$0xff] %vm808, %v753
        %830 = vst.msk [vmem:[#allocation2 + $0xa8] sm:$0xff] %vm808, %v755
        %831 = vst.msk [vmem:[#allocation2 + $0xb0] sm:$0xff] %vm808, %v757
        %832 = vst.msk [vmem:[#allocation2 + $0xb8] sm:$0xff] %vm808, %v759
        %833 = vst.msk [vmem:[#allocation2 + $0xc0] sm:$0xff] %vm808, %v761
        %834 = vst.msk [vmem:[#allocation2 + $0xc8] sm:$0xff] %vm808, %v763
        %835 = vst.msk [vmem:[#allocation2 + $0xd0] sm:$0xff] %vm808, %v765
        %836 = vst.msk [vmem:[#allocation2 + $0xd8] sm:$0xff] %vm808, %v767
        %837 = vst.msk [vmem:[#allocation2 + $0xe0] sm:$0xff] %vm808, %v769
        %838 = vst.msk [vmem:[#allocation2 + $0xe8] sm:$0xff] %vm808, %v771
        %839 = vst.msk [vmem:[#allocation2 + $0xf0] sm:$0xff] %vm808, %v773
        %840 = vst.msk [vmem:[#allocation2 + $0xf8] sm:$0xff] %vm808, %v775
        %v841 = vld [vmem:[%s647 + $0x1] sm:$0xff]
        %v842 = vld [vmem:[%s647 + $0x9] sm:$0xff]
        %v843 = vld [vmem:[%s647 + $0x19] sm:$0xff]
        %v844 = vld [vmem:[%s647 + $0x21] sm:$0xff]
        %v845 = vld [vmem:[%s647 + $0x31] sm:$0xff]
        %v846 = vld [vmem:[%s647 + $0x39] sm:$0xff]
        %v847 = vld [vmem:[%s647 + $0x49] sm:$0xff]
        %v848 = vld [vmem:[%s647 + $0x51] sm:$0xff]
        %v849 = vld [vmem:[%s647 + $0x61] sm:$0xff]
        %v850 = vld [vmem:[%s647 + $0x69] sm:$0xff]
        %v851 = vld [vmem:[%s647 + $0x79] sm:$0xff]
        %v852 = vld [vmem:[%s647 + $0x81] sm:$0xff]
        %v853 = vld [vmem:[%s647 + $0x91] sm:$0xff]
        %v854 = vld [vmem:[%s647 + $0x99] sm:$0xff]
        %v855 = vld [vmem:[%s647 + $0xa9] sm:$0xff]
        %v856 = vld [vmem:[%s647 + $0xb1] sm:$0xff]
        %v857 = vld [vmem:[%s647 + $0xc1] sm:$0xff]
        %v858 = vld [vmem:[%s647 + $0xc9] sm:$0xff]
        %v859 = vld [vmem:[%s647 + $0xd9] sm:$0xff]
        %v860 = vld [vmem:[%s647 + $0xe1] sm:$0xff]
        %v861 = vld [vmem:[%s647 + $0xf1] sm:$0xff]
        %v862 = vld [vmem:[%s647 + $0xf9] sm:$0xff]
        %v863 = vld [vmem:[%s647 + $0x109] sm:$0xff]
        %v864 = vld [vmem:[%s647 + $0x111] sm:$0xff]
        %v865 = vld [vmem:[%s647 + $0x121] sm:$0xff]
        %v866 = vld [vmem:[%s647 + $0x129] sm:$0xff]
        %v867 = vld [vmem:[%s647 + $0x139] sm:$0xff]
        %v868 = vld [vmem:[%s647 + $0x141] sm:$0xff]
        %v869 = vld [vmem:[%s647 + $0x151] sm:$0xff]
        %v870 = vld [vmem:[%s647 + $0x159] sm:$0xff]
        %v871 = vld [vmem:[%s647 + $0x169] sm:$0xff]
        %v872 = vld [vmem:[%s647 + $0x171] sm:$0xff]
        %905 = vrot.lane.b32.xlu0 %v841, 16
        %v906 = vpop.permute.xlu0 %905
        %907 = vrot.lane.b32.xlu0 %v842, 16
        %v908 = vpop.permute.xlu0 %907
        %909 = vrot.lane.b32.xlu0 %v843, 16
        %v910 = vpop.permute.xlu0 %909
        %911 = vrot.lane.b32.xlu0 %v844, 16
        %v912 = vpop.permute.xlu0 %911
        %913 = vrot.lane.b32.xlu0 %v845, 16
        %v914 = vpop.permute.xlu0 %913
        %915 = vrot.lane.b32.xlu0 %v846, 16
        %v916 = vpop.permute.xlu0 %915
        %917 = vrot.lane.b32.xlu0 %v847, 16
        %v918 = vpop.permute.xlu0 %917
        %919 = vrot.lane.b32.xlu0 %v848, 16
        %v920 = vpop.permute.xlu0 %919
        %921 = vrot.lane.b32.xlu0 %v849, 16
        %v922 = vpop.permute.xlu0 %921
        %923 = vrot.lane.b32.xlu0 %v850, 16
        %v924 = vpop.permute.xlu0 %923
        %925 = vrot.lane.b32.xlu0 %v851, 16
        %v926 = vpop.permute.xlu0 %925
        %927 = vrot.lane.b32.xlu0 %v852, 16
        %v928 = vpop.permute.xlu0 %927
        %929 = vrot.lane.b32.xlu0 %v853, 16
        %v930 = vpop.permute.xlu0 %929
        %931 = vrot.lane.b32.xlu0 %v854, 16
        %v932 = vpop.permute.xlu0 %931
        %933 = vrot.lane.b32.xlu0 %v855, 16
        %v934 = vpop.permute.xlu0 %933
        %935 = vrot.lane.b32.xlu0 %v856, 16
        %v936 = vpop.permute.xlu0 %935
        %937 = vrot.lane.b32.xlu0 %v857, 16
        %v938 = vpop.permute.xlu0 %937
        %939 = vrot.lane.b32.xlu0 %v858, 16
        %v940 = vpop.permute.xlu0 %939
        %941 = vrot.lane.b32.xlu0 %v859, 16
        %v942 = vpop.permute.xlu0 %941
        %943 = vrot.lane.b32.xlu0 %v860, 16
        %v944 = vpop.permute.xlu0 %943
        %945 = vrot.lane.b32.xlu0 %v861, 16
        %v946 = vpop.permute.xlu0 %945
        %947 = vrot.lane.b32.xlu0 %v862, 16
        %v948 = vpop.permute.xlu0 %947
        %949 = vrot.lane.b32.xlu0 %v863, 16
        %v950 = vpop.permute.xlu0 %949
        %951 = vrot.lane.b32.xlu0 %v864, 16
        %v952 = vpop.permute.xlu0 %951
        %953 = vrot.lane.b32.xlu0 %v865, 16
        %v954 = vpop.permute.xlu0 %953
        %955 = vrot.lane.b32.xlu0 %v866, 16
        %v956 = vpop.permute.xlu0 %955
        %957 = vrot.lane.b32.xlu0 %v867, 16
        %v958 = vpop.permute.xlu0 %957
        %959 = vrot.lane.b32.xlu0 %v868, 16
        %v960 = vpop.permute.xlu0 %959
        %961 = vrot.lane.b32.xlu0 %v869, 16
        %v962 = vpop.permute.xlu0 %961
        %963 = vrot.lane.b32.xlu0 %v870, 16
        %v964 = vpop.permute.xlu0 %963
        %965 = vrot.lane.b32.xlu0 %v871, 16
        %v966 = vpop.permute.xlu0 %965
        %967 = vrot.lane.b32.xlu0 %v872, 16
        %v968 = vpop.permute.xlu0 %967
        %vm1001 = vcmask 162944
        %1002 = vst.msk [vmem:[#allocation2] sm:$0xff] %vm1001, %v906
        %1003 = vst.msk [vmem:[#allocation2 + $0x8] sm:$0xff] %vm1001, %v908
        %1004 = vst.msk [vmem:[#allocation2 + $0x10] sm:$0xff] %vm1001, %v910
        %1005 = vst.msk [vmem:[#allocation2 + $0x18] sm:$0xff] %vm1001, %v912
        %1006 = vst.msk [vmem:[#allocation2 + $0x20] sm:$0xff] %vm1001, %v914
        %1007 = vst.msk [vmem:[#allocation2 + $0x28] sm:$0xff] %vm1001, %v916
        %1008 = vst.msk [vmem:[#allocation2 + $0x30] sm:$0xff] %vm1001, %v918
        %1009 = vst.msk [vmem:[#allocation2 + $0x38] sm:$0xff] %vm1001, %v920
        %1010 = vst.msk [vmem:[#allocation2 + $0x40] sm:$0xff] %vm1001, %v922
        %1011 = vst.msk [vmem:[#allocation2 + $0x48] sm:$0xff] %vm1001, %v924
        %1012 = vst.msk [vmem:[#allocation2 + $0x50] sm:$0xff] %vm1001, %v926
        %1013 = vst.msk [vmem:[#allocation2 + $0x58] sm:$0xff] %vm1001, %v928
        %1014 = vst.msk [vmem:[#allocation2 + $0x60] sm:$0xff] %vm1001, %v930
        %1015 = vst.msk [vmem:[#allocation2 + $0x68] sm:$0xff] %vm1001, %v932
        %1016 = vst.msk [vmem:[#allocation2 + $0x70] sm:$0xff] %vm1001, %v934
        %1017 = vst.msk [vmem:[#allocation2 + $0x78] sm:$0xff] %vm1001, %v936
        %1018 = vst.msk [vmem:[#allocation2 + $0x80] sm:$0xff] %vm1001, %v938
        %1019 = vst.msk [vmem:[#allocation2 + $0x88] sm:$0xff] %vm1001, %v940
        %1020 = vst.msk [vmem:[#allocation2 + $0x90] sm:$0xff] %vm1001, %v942
        %1021 = vst.msk [vmem:[#allocation2 + $0x98] sm:$0xff] %vm1001, %v944
        %1022 = vst.msk [vmem:[#allocation2 + $0xa0] sm:$0xff] %vm1001, %v946
        %1023 = vst.msk [vmem:[#allocation2 + $0xa8] sm:$0xff] %vm1001, %v948
        %1024 = vst.msk [vmem:[#allocation2 + $0xb0] sm:$0xff] %vm1001, %v950
        %1025 = vst.msk [vmem:[#allocation2 + $0xb8] sm:$0xff] %vm1001, %v952
        %1026 = vst.msk [vmem:[#allocation2 + $0xc0] sm:$0xff] %vm1001, %v954
        %1027 = vst.msk [vmem:[#allocation2 + $0xc8] sm:$0xff] %vm1001, %v956
        %1028 = vst.msk [vmem:[#allocation2 + $0xd0] sm:$0xff] %vm1001, %v958
        %1029 = vst.msk [vmem:[#allocation2 + $0xd8] sm:$0xff] %vm1001, %v960
        %1030 = vst.msk [vmem:[#allocation2 + $0xe0] sm:$0xff] %vm1001, %v962
        %1031 = vst.msk [vmem:[#allocation2 + $0xe8] sm:$0xff] %vm1001, %v964
        %1032 = vst.msk [vmem:[#allocation2 + $0xf0] sm:$0xff] %vm1001, %v966
        %1033 = vst.msk [vmem:[#allocation2 + $0xf8] sm:$0xff] %vm1001, %v968
        %v1034 = vld [vmem:[%s647 + $0x2] sm:$0xff]
        %v1035 = vld [vmem:[%s647 + $0xa] sm:$0xff]
        %v1036 = vld [vmem:[%s647 + $0x1a] sm:$0xff]
        %v1037 = vld [vmem:[%s647 + $0x22] sm:$0xff]
        %v1038 = vld [vmem:[%s647 + $0x32] sm:$0xff]
        %v1039 = vld [vmem:[%s647 + $0x3a] sm:$0xff]
        %v1040 = vld [vmem:[%s647 + $0x4a] sm:$0xff]
        %v1041 = vld [vmem:[%s647 + $0x52] sm:$0xff]
        %v1042 = vld [vmem:[%s647 + $0x62] sm:$0xff]
        %v1043 = vld [vmem:[%s647 + $0x6a] sm:$0xff]
        %v1044 = vld [vmem:[%s647 + $0x7a] sm:$0xff]
        %v1045 = vld [vmem:[%s647 + $0x82] sm:$0xff]
        %v1046 = vld [vmem:[%s647 + $0x92] sm:$0xff]
        %v1047 = vld [vmem:[%s647 + $0x9a] sm:$0xff]
        %v1048 = vld [vmem:[%s647 + $0xaa] sm:$0xff]
        %v1049 = vld [vmem:[%s647 + $0xb2] sm:$0xff]
        %v1050 = vld [vmem:[%s647 + $0xc2] sm:$0xff]
        %v1051 = vld [vmem:[%s647 + $0xca] sm:$0xff]
        %v1052 = vld [vmem:[%s647 + $0xda] sm:$0xff]
        %v1053 = vld [vmem:[%s647 + $0xe2] sm:$0xff]
        %v1054 = vld [vmem:[%s647 + $0xf2] sm:$0xff]
        %v1055 = vld [vmem:[%s647 + $0xfa] sm:$0xff]
        %v1056 = vld [vmem:[%s647 + $0x10a] sm:$0xff]
        %v1057 = vld [vmem:[%s647 + $0x112] sm:$0xff]
        %v1058 = vld [vmem:[%s647 + $0x122] sm:$0xff]
        %v1059 = vld [vmem:[%s647 + $0x12a] sm:$0xff]
        %v1060 = vld [vmem:[%s647 + $0x13a] sm:$0xff]
        %v1061 = vld [vmem:[%s647 + $0x142] sm:$0xff]
        %v1062 = vld [vmem:[%s647 + $0x152] sm:$0xff]
        %v1063 = vld [vmem:[%s647 + $0x15a] sm:$0xff]
        %v1064 = vld [vmem:[%s647 + $0x16a] sm:$0xff]
        %v1065 = vld [vmem:[%s647 + $0x172] sm:$0xff]
        %1098 = vrot.lane.b32.xlu0 %v1034, 20
        %v1099 = vpop.permute.xlu0 %1098
        %1100 = vrot.lane.b32.xlu0 %v1035, 20
        %v1101 = vpop.permute.xlu0 %1100
        %1102 = vrot.lane.b32.xlu0 %v1036, 20
        %v1103 = vpop.permute.xlu0 %1102
        %1104 = vrot.lane.b32.xlu0 %v1037, 20
        %v1105 = vpop.permute.xlu0 %1104
        %1106 = vrot.lane.b32.xlu0 %v1038, 20
        %v1107 = vpop.permute.xlu0 %1106
        %1108 = vrot.lane.b32.xlu0 %v1039, 20
        %v1109 = vpop.permute.xlu0 %1108
        %1110 = vrot.lane.b32.xlu0 %v1040, 20
        %v1111 = vpop.permute.xlu0 %1110
        %1112 = vrot.lane.b32.xlu0 %v1041, 20
        %v1113 = vpop.permute.xlu0 %1112
        %1114 = vrot.lane.b32.xlu0 %v1042, 20
        %v1115 = vpop.permute.xlu0 %1114
        %1116 = vrot.lane.b32.xlu0 %v1043, 20
        %v1117 = vpop.permute.xlu0 %1116
        %1118 = vrot.lane.b32.xlu0 %v1044, 20
        %v1119 = vpop.permute.xlu0 %1118
        %1120 = vrot.lane.b32.xlu0 %v1045, 20
        %v1121 = vpop.permute.xlu0 %1120
        %1122 = vrot.lane.b32.xlu0 %v1046, 20
        %v1123 = vpop.permute.xlu0 %1122
        %1124 = vrot.lane.b32.xlu0 %v1047, 20
        %v1125 = vpop.permute.xlu0 %1124
        %1126 = vrot.lane.b32.xlu0 %v1048, 20
        %v1127 = vpop.permute.xlu0 %1126
        %1128 = vrot.lane.b32.xlu0 %v1049, 20
        %v1129 = vpop.permute.xlu0 %1128
        %1130 = vrot.lane.b32.xlu0 %v1050, 20
        %v1131 = vpop.permute.xlu0 %1130
        %1132 = vrot.lane.b32.xlu0 %v1051, 20
        %v1133 = vpop.permute.xlu0 %1132
        %1134 = vrot.lane.b32.xlu0 %v1052, 20
        %v1135 = vpop.permute.xlu0 %1134
        %1136 = vrot.lane.b32.xlu0 %v1053, 20
        %v1137 = vpop.permute.xlu0 %1136
        %1138 = vrot.lane.b32.xlu0 %v1054, 20
        %v1139 = vpop.permute.xlu0 %1138
        %1140 = vrot.lane.b32.xlu0 %v1055, 20
        %v1141 = vpop.permute.xlu0 %1140
        %1142 = vrot.lane.b32.xlu0 %v1056, 20
        %v1143 = vpop.permute.xlu0 %1142
        %1144 = vrot.lane.b32.xlu0 %v1057, 20
        %v1145 = vpop.permute.xlu0 %1144
        %1146 = vrot.lane.b32.xlu0 %v1058, 20
        %v1147 = vpop.permute.xlu0 %1146
        %1148 = vrot.lane.b32.xlu0 %v1059, 20
        %v1149 = vpop.permute.xlu0 %1148
        %1150 = vrot.lane.b32.xlu0 %v1060, 20
        %v1151 = vpop.permute.xlu0 %1150
        %1152 = vrot.lane.b32.xlu0 %v1061, 20
        %v1153 = vpop.permute.xlu0 %1152
        %1154 = vrot.lane.b32.xlu0 %v1062, 20
        %v1155 = vpop.permute.xlu0 %1154
        %1156 = vrot.lane.b32.xlu0 %v1063, 20
        %v1157 = vpop.permute.xlu0 %1156
        %1158 = vrot.lane.b32.xlu0 %v1064, 20
        %v1159 = vpop.permute.xlu0 %1158
        %1160 = vrot.lane.b32.xlu0 %v1065, 20
        %v1161 = vpop.permute.xlu0 %1160
        %vm1194 = vcmask 195744
        %1195 = vst.msk [vmem:[#allocation2] sm:$0xff] %vm1194, %v1099
        %1196 = vst.msk [vmem:[#allocation2 + $0x8] sm:$0xff] %vm1194, %v1101
        %1197 = vst.msk [vmem:[#allocation2 + $0x10] sm:$0xff] %vm1194, %v1103
        %1198 = vst.msk [vmem:[#allocation2 + $0x18] sm:$0xff] %vm1194, %v1105
        %1199 = vst.msk [vmem:[#allocation2 + $0x20] sm:$0xff] %vm1194, %v1107
        %1200 = vst.msk [vmem:[#allocation2 + $0x28] sm:$0xff] %vm1194, %v1109
        %1201 = vst.msk [vmem:[#allocation2 + $0x30] sm:$0xff] %vm1194, %v1111
        %1202 = vst.msk [vmem:[#allocation2 + $0x38] sm:$0xff] %vm1194, %v1113
        %1203 = vst.msk [vmem:[#allocation2 + $0x40] sm:$0xff] %vm1194, %v1115
        %1204 = vst.msk [vmem:[#allocation2 + $0x48] sm:$0xff] %vm1194, %v1117
        %1205 = vst.msk [vmem:[#allocation2 + $0x50] sm:$0xff] %vm1194, %v1119
        %1206 = vst.msk [vmem:[#allocation2 + $0x58] sm:$0xff] %vm1194, %v1121
        %1207 = vst.msk [vmem:[#allocation2 + $0x60] sm:$0xff] %vm1194, %v1123
        %1208 = vst.msk [vmem:[#allocation2 + $0x68] sm:$0xff] %vm1194, %v1125
        %1209 = vst.msk [vmem:[#allocation2 + $0x70] sm:$0xff] %vm1194, %v1127
        %1210 = vst.msk [vmem:[#allocation2 + $0x78] sm:$0xff] %vm1194, %v1129
        %1211 = vst.msk [vmem:[#allocation2 + $0x80] sm:$0xff] %vm1194, %v1131
        %1212 = vst.msk [vmem:[#allocation2 + $0x88] sm:$0xff] %vm1194, %v1133
        %1213 = vst.msk [vmem:[#allocation2 + $0x90] sm:$0xff] %vm1194, %v1135
        %1214 = vst.msk [vmem:[#allocation2 + $0x98] sm:$0xff] %vm1194, %v1137
        %1215 = vst.msk [vmem:[#allocation2 + $0xa0] sm:$0xff] %vm1194, %v1139
        %1216 = vst.msk [vmem:[#allocation2 + $0xa8] sm:$0xff] %vm1194, %v1141
        %1217 = vst.msk [vmem:[#allocation2 + $0xb0] sm:$0xff] %vm1194, %v1143
        %1218 = vst.msk [vmem:[#allocation2 + $0xb8] sm:$0xff] %vm1194, %v1145
        %1219 = vst.msk [vmem:[#allocation2 + $0xc0] sm:$0xff] %vm1194, %v1147
        %1220 = vst.msk [vmem:[#allocation2 + $0xc8] sm:$0xff] %vm1194, %v1149
        %1221 = vst.msk [vmem:[#allocation2 + $0xd0] sm:$0xff] %vm1194, %v1151
        %1222 = vst.msk [vmem:[#allocation2 + $0xd8] sm:$0xff] %vm1194, %v1153
        %1223 = vst.msk [vmem:[#allocation2 + $0xe0] sm:$0xff] %vm1194, %v1155
        %1224 = vst.msk [vmem:[#allocation2 + $0xe8] sm:$0xff] %vm1194, %v1157
        %1225 = vst.msk [vmem:[#allocation2 + $0xf0] sm:$0xff] %vm1194, %v1159
        %1226 = vst.msk [vmem:[#allocation2 + $0xf8] sm:$0xff] %vm1194, %v1161
        %s1227 = sadd.s32 %s191, 2
        %s1228 = smul.u32 %s1227, 24
        %s1229 = scalar_lea.vmem %s166, %s1228 [#allocation3]
        %v1230 = vld [vmem:[%s1229] sm:$0xff]
        %v1231 = vld [vmem:[%s1229 + $0x8] sm:$0xff]
        %v1232 = vld [vmem:[%s1229 + $0x18] sm:$0xff]
        %v1233 = vld [vmem:[%s1229 + $0x20] sm:$0xff]
        %v1234 = vld [vmem:[%s1229 + $0x30] sm:$0xff]
        %v1235 = vld [vmem:[%s1229 + $0x38] sm:$0xff]
        %v1236 = vld [vmem:[%s1229 + $0x48] sm:$0xff]
        %v1237 = vld [vmem:[%s1229 + $0x50] sm:$0xff]
        %v1238 = vld [vmem:[%s1229 + $0x60] sm:$0xff]
        %v1239 = vld [vmem:[%s1229 + $0x68] sm:$0xff]
        %v1240 = vld [vmem:[%s1229 + $0x78] sm:$0xff]
        %v1241 = vld [vmem:[%s1229 + $0x80] sm:$0xff]
        %v1242 = vld [vmem:[%s1229 + $0x90] sm:$0xff]
        %v1243 = vld [vmem:[%s1229 + $0x98] sm:$0xff]
        %v1244 = vld [vmem:[%s1229 + $0xa8] sm:$0xff]
        %v1245 = vld [vmem:[%s1229 + $0xb0] sm:$0xff]
        %v1246 = vld [vmem:[%s1229 + $0xc0] sm:$0xff]
        %v1247 = vld [vmem:[%s1229 + $0xc8] sm:$0xff]
        %v1248 = vld [vmem:[%s1229 + $0xd8] sm:$0xff]
        %v1249 = vld [vmem:[%s1229 + $0xe0] sm:$0xff]
        %v1250 = vld [vmem:[%s1229 + $0xf0] sm:$0xff]
        %v1251 = vld [vmem:[%s1229 + $0xf8] sm:$0xff]
        %v1252 = vld [vmem:[%s1229 + $0x108] sm:$0xff]
        %v1253 = vld [vmem:[%s1229 + $0x110] sm:$0xff]
        %v1254 = vld [vmem:[%s1229 + $0x120] sm:$0xff]
        %v1255 = vld [vmem:[%s1229 + $0x128] sm:$0xff]
        %v1256 = vld [vmem:[%s1229 + $0x138] sm:$0xff]
        %v1257 = vld [vmem:[%s1229 + $0x140] sm:$0xff]
        %v1258 = vld [vmem:[%s1229 + $0x150] sm:$0xff]
        %v1259 = vld [vmem:[%s1229 + $0x158] sm:$0xff]
        %v1260 = vld [vmem:[%s1229 + $0x168] sm:$0xff]
        %v1261 = vld [vmem:[%s1229 + $0x170] sm:$0xff]
        %1294 = vrot.lane.b32.xlu0 %v1230, 24
        %v1295 = vpop.permute.xlu0 %1294
        %1296 = vrot.lane.b32.xlu0 %v1231, 24
        %v1297 = vpop.permute.xlu0 %1296
        %1298 = vrot.lane.b32.xlu0 %v1232, 24
        %v1299 = vpop.permute.xlu0 %1298
        %1300 = vrot.lane.b32.xlu0 %v1233, 24
        %v1301 = vpop.permute.xlu0 %1300
        %1302 = vrot.lane.b32.xlu0 %v1234, 24
        %v1303 = vpop.permute.xlu0 %1302
        %1304 = vrot.lane.b32.xlu0 %v1235, 24
        %v1305 = vpop.permute.xlu0 %1304
        %1306 = vrot.lane.b32.xlu0 %v1236, 24
        %v1307 = vpop.permute.xlu0 %1306
        %1308 = vrot.lane.b32.xlu0 %v1237, 24
        %v1309 = vpop.permute.xlu0 %1308
        %1310 = vrot.lane.b32.xlu0 %v1238, 24
        %v1311 = vpop.permute.xlu0 %1310
        %1312 = vrot.lane.b32.xlu0 %v1239, 24
        %v1313 = vpop.permute.xlu0 %1312
        %1314 = vrot.lane.b32.xlu0 %v1240, 24
        %v1315 = vpop.permute.xlu0 %1314
        %1316 = vrot.lane.b32.xlu0 %v1241, 24
        %v1317 = vpop.permute.xlu0 %1316
        %1318 = vrot.lane.b32.xlu0 %v1242, 24
        %v1319 = vpop.permute.xlu0 %1318
        %1320 = vrot.lane.b32.xlu0 %v1243, 24
        %v1321 = vpop.permute.xlu0 %1320
        %1322 = vrot.lane.b32.xlu0 %v1244, 24
        %v1323 = vpop.permute.xlu0 %1322
        %1324 = vrot.lane.b32.xlu0 %v1245, 24
        %v1325 = vpop.permute.xlu0 %1324
        %1326 = vrot.lane.b32.xlu0 %v1246, 24
        %v1327 = vpop.permute.xlu0 %1326
        %1328 = vrot.lane.b32.xlu0 %v1247, 24
        %v1329 = vpop.permute.xlu0 %1328
        %1330 = vrot.lane.b32.xlu0 %v1248, 24
        %v1331 = vpop.permute.xlu0 %1330
        %1332 = vrot.lane.b32.xlu0 %v1249, 24
        %v1333 = vpop.permute.xlu0 %1332
        %1334 = vrot.lane.b32.xlu0 %v1250, 24
        %v1335 = vpop.permute.xlu0 %1334
        %1336 = vrot.lane.b32.xlu0 %v1251, 24
        %v1337 = vpop.permute.xlu0 %1336
        %1338 = vrot.lane.b32.xlu0 %v1252, 24
        %v1339 = vpop.permute.xlu0 %1338
        %1340 = vrot.lane.b32.xlu0 %v1253, 24
        %v1341 = vpop.permute.xlu0 %1340
        %1342 = vrot.lane.b32.xlu0 %v1254, 24
        %v1343 = vpop.permute.xlu0 %1342
        %1344 = vrot.lane.b32.xlu0 %v1255, 24
        %v1345 = vpop.permute.xlu0 %1344
        %1346 = vrot.lane.b32.xlu0 %v1256, 24
        %v1347 = vpop.permute.xlu0 %1346
        %1348 = vrot.lane.b32.xlu0 %v1257, 24
        %v1349 = vpop.permute.xlu0 %1348
        %1350 = vrot.lane.b32.xlu0 %v1258, 24
        %v1351 = vpop.permute.xlu0 %1350
        %1352 = vrot.lane.b32.xlu0 %v1259, 24
        %v1353 = vpop.permute.xlu0 %1352
        %1354 = vrot.lane.b32.xlu0 %v1260, 24
        %v1355 = vpop.permute.xlu0 %1354
        %1356 = vrot.lane.b32.xlu0 %v1261, 24
        %v1357 = vpop.permute.xlu0 %1356
        %vm1390 = vcmask 228544
        %1391 = vst.msk [vmem:[#allocation2] sm:$0xff] %vm1390, %v1295
        %1392 = vst.msk [vmem:[#allocation2 + $0x8] sm:$0xff] %vm1390, %v1297
        %1393 = vst.msk [vmem:[#allocation2 + $0x10] sm:$0xff] %vm1390, %v1299
        %1394 = vst.msk [vmem:[#allocation2 + $0x18] sm:$0xff] %vm1390, %v1301
        %1395 = vst.msk [vmem:[#allocation2 + $0x20] sm:$0xff] %vm1390, %v1303
        %1396 = vst.msk [vmem:[#allocation2 + $0x28] sm:$0xff] %vm1390, %v1305
        %1397 = vst.msk [vmem:[#allocation2 + $0x30] sm:$0xff] %vm1390, %v1307
        %1398 = vst.msk [vmem:[#allocation2 + $0x38] sm:$0xff] %vm1390, %v1309
        %1399 = vst.msk [vmem:[#allocation2 + $0x40] sm:$0xff] %vm1390, %v1311
        %1400 = vst.msk [vmem:[#allocation2 + $0x48] sm:$0xff] %vm1390, %v1313
        %1401 = vst.msk [vmem:[#allocation2 + $0x50] sm:$0xff] %vm1390, %v1315
        %1402 = vst.msk [vmem:[#allocation2 + $0x58] sm:$0xff] %vm1390, %v1317
        %1403 = vst.msk [vmem:[#allocation2 + $0x60] sm:$0xff] %vm1390, %v1319
        %1404 = vst.msk [vmem:[#allocation2 + $0x68] sm:$0xff] %vm1390, %v1321
        %1405 = vst.msk [vmem:[#allocation2 + $0x70] sm:$0xff] %vm1390, %v1323
        %1406 = vst.msk [vmem:[#allocation2 + $0x78] sm:$0xff] %vm1390, %v1325
        %1407 = vst.msk [vmem:[#allocation2 + $0x80] sm:$0xff] %vm1390, %v1327
        %1408 = vst.msk [vmem:[#allocation2 + $0x88] sm:$0xff] %vm1390, %v1329
        %1409 = vst.msk [vmem:[#allocation2 + $0x90] sm:$0xff] %vm1390, %v1331
        %1410 = vst.msk [vmem:[#allocation2 + $0x98] sm:$0xff] %vm1390, %v1333
        %1411 = vst.msk [vmem:[#allocation2 + $0xa0] sm:$0xff] %vm1390, %v1335
        %1412 = vst.msk [vmem:[#allocation2 + $0xa8] sm:$0xff] %vm1390, %v1337
        %1413 = vst.msk [vmem:[#allocation2 + $0xb0] sm:$0xff] %vm1390, %v1339
        %1414 = vst.msk [vmem:[#allocation2 + $0xb8] sm:$0xff] %vm1390, %v1341
        %1415 = vst.msk [vmem:[#allocation2 + $0xc0] sm:$0xff] %vm1390, %v1343
        %1416 = vst.msk [vmem:[#allocation2 + $0xc8] sm:$0xff] %vm1390, %v1345
        %1417 = vst.msk [vmem:[#allocation2 + $0xd0] sm:$0xff] %vm1390, %v1347
        %1418 = vst.msk [vmem:[#allocation2 + $0xd8] sm:$0xff] %vm1390, %v1349
        %1419 = vst.msk [vmem:[#allocation2 + $0xe0] sm:$0xff] %vm1390, %v1351
        %1420 = vst.msk [vmem:[#allocation2 + $0xe8] sm:$0xff] %vm1390, %v1353
        %1421 = vst.msk [vmem:[#allocation2 + $0xf0] sm:$0xff] %vm1390, %v1355
        %1422 = vst.msk [vmem:[#allocation2 + $0xf8] sm:$0xff] %vm1390, %v1357
        %v1423 = vld [vmem:[%s1229 + $0x1] sm:$0xff]
        %v1424 = vld [vmem:[%s1229 + $0x9] sm:$0xff]
        %v1425 = vld [vmem:[%s1229 + $0x19] sm:$0xff]
        %v1426 = vld [vmem:[%s1229 + $0x21] sm:$0xff]
        %v1427 = vld [vmem:[%s1229 + $0x31] sm:$0xff]
        %v1428 = vld [vmem:[%s1229 + $0x39] sm:$0xff]
        %v1429 = vld [vmem:[%s1229 + $0x49] sm:$0xff]
        %v1430 = vld [vmem:[%s1229 + $0x51] sm:$0xff]
        %v1431 = vld [vmem:[%s1229 + $0x61] sm:$0xff]
        %v1432 = vld [vmem:[%s1229 + $0x69] sm:$0xff]
        %v1433 = vld [vmem:[%s1229 + $0x79] sm:$0xff]
        %v1434 = vld [vmem:[%s1229 + $0x81] sm:$0xff]
        %v1435 = vld [vmem:[%s1229 + $0x91] sm:$0xff]
        %v1436 = vld [vmem:[%s1229 + $0x99] sm:$0xff]
        %v1437 = vld [vmem:[%s1229 + $0xa9] sm:$0xff]
        %v1438 = vld [vmem:[%s1229 + $0xb1] sm:$0xff]
        %v1439 = vld [vmem:[%s1229 + $0xc1] sm:$0xff]
        %v1440 = vld [vmem:[%s1229 + $0xc9] sm:$0xff]
        %v1441 = vld [vmem:[%s1229 + $0xd9] sm:$0xff]
        %v1442 = vld [vmem:[%s1229 + $0xe1] sm:$0xff]
        %v1443 = vld [vmem:[%s1229 + $0xf1] sm:$0xff]
        %v1444 = vld [vmem:[%s1229 + $0xf9] sm:$0xff]
        %v1445 = vld [vmem:[%s1229 + $0x109] sm:$0xff]
        %v1446 = vld [vmem:[%s1229 + $0x111] sm:$0xff]
        %v1447 = vld [vmem:[%s1229 + $0x121] sm:$0xff]
        %v1448 = vld [vmem:[%s1229 + $0x129] sm:$0xff]
        %v1449 = vld [vmem:[%s1229 + $0x139] sm:$0xff]
        %v1450 = vld [vmem:[%s1229 + $0x141] sm:$0xff]
        %v1451 = vld [vmem:[%s1229 + $0x151] sm:$0xff]
        %v1452 = vld [vmem:[%s1229 + $0x159] sm:$0xff]
        %v1453 = vld [vmem:[%s1229 + $0x169] sm:$0xff]
        %v1454 = vld [vmem:[%s1229 + $0x171] sm:$0xff]
        %1487 = vrot.lane.b32.xlu0 %v1423, 28
        %v1488 = vpop.permute.xlu0 %1487
        %1489 = vrot.lane.b32.xlu0 %v1424, 28
        %v1490 = vpop.permute.xlu0 %1489
        %1491 = vrot.lane.b32.xlu0 %v1425, 28
        %v1492 = vpop.permute.xlu0 %1491
        %1493 = vrot.lane.b32.xlu0 %v1426, 28
        %v1494 = vpop.permute.xlu0 %1493
        %1495 = vrot.lane.b32.xlu0 %v1427, 28
        %v1496 = vpop.permute.xlu0 %1495
        %1497 = vrot.lane.b32.xlu0 %v1428, 28
        %v1498 = vpop.permute.xlu0 %1497
        %1499 = vrot.lane.b32.xlu0 %v1429, 28
        %v1500 = vpop.permute.xlu0 %1499
        %1501 = vrot.lane.b32.xlu0 %v1430, 28
        %v1502 = vpop.permute.xlu0 %1501
        %1503 = vrot.lane.b32.xlu0 %v1431, 28
        %v1504 = vpop.permute.xlu0 %1503
        %1505 = vrot.lane.b32.xlu0 %v1432, 28
        %v1506 = vpop.permute.xlu0 %1505
        %1507 = vrot.lane.b32.xlu0 %v1433, 28
        %v1508 = vpop.permute.xlu0 %1507
        %1509 = vrot.lane.b32.xlu0 %v1434, 28
        %v1510 = vpop.permute.xlu0 %1509
        %1511 = vrot.lane.b32.xlu0 %v1435, 28
        %v1512 = vpop.permute.xlu0 %1511
        %1513 = vrot.lane.b32.xlu0 %v1436, 28
        %v1514 = vpop.permute.xlu0 %1513
        %1515 = vrot.lane.b32.xlu0 %v1437, 28
        %v1516 = vpop.permute.xlu0 %1515
        %1517 = vrot.lane.b32.xlu0 %v1438, 28
        %v1518 = vpop.permute.xlu0 %1517
        %1519 = vrot.lane.b32.xlu0 %v1439, 28
        %v1520 = vpop.permute.xlu0 %1519
        %1521 = vrot.lane.b32.xlu0 %v1440, 28
        %v1522 = vpop.permute.xlu0 %1521
        %1523 = vrot.lane.b32.xlu0 %v1441, 28
        %v1524 = vpop.permute.xlu0 %1523
        %1525 = vrot.lane.b32.xlu0 %v1442, 28
        %v1526 = vpop.permute.xlu0 %1525
        %1527 = vrot.lane.b32.xlu0 %v1443, 28
        %v1528 = vpop.permute.xlu0 %1527
        %1529 = vrot.lane.b32.xlu0 %v1444, 28
        %v1530 = vpop.permute.xlu0 %1529
        %1531 = vrot.lane.b32.xlu0 %v1445, 28
        %v1532 = vpop.permute.xlu0 %1531
        %1533 = vrot.lane.b32.xlu0 %v1446, 28
        %v1534 = vpop.permute.xlu0 %1533
        %1535 = vrot.lane.b32.xlu0 %v1447, 28
        %v1536 = vpop.permute.xlu0 %1535
        %1537 = vrot.lane.b32.xlu0 %v1448, 28
        %v1538 = vpop.permute.xlu0 %1537
        %1539 = vrot.lane.b32.xlu0 %v1449, 28
        %v1540 = vpop.permute.xlu0 %1539
        %1541 = vrot.lane.b32.xlu0 %v1450, 28
        %v1542 = vpop.permute.xlu0 %1541
        %1543 = vrot.lane.b32.xlu0 %v1451, 28
        %v1544 = vpop.permute.xlu0 %1543
        %1545 = vrot.lane.b32.xlu0 %v1452, 28
        %v1546 = vpop.permute.xlu0 %1545
        %1547 = vrot.lane.b32.xlu0 %v1453, 28
        %v1548 = vpop.permute.xlu0 %1547
        %1549 = vrot.lane.b32.xlu0 %v1454, 28
        %v1550 = vpop.permute.xlu0 %1549
        %vm1583 = vcmask 261344
        %1584 = vst.msk [vmem:[#allocation2] sm:$0xff] %vm1583, %v1488
        %1585 = vst.msk [vmem:[#allocation2 + $0x8] sm:$0xff] %vm1583, %v1490
        %1586 = vst.msk [vmem:[#allocation2 + $0x10] sm:$0xff] %vm1583, %v1492
        %1587 = vst.msk [vmem:[#allocation2 + $0x18] sm:$0xff] %vm1583, %v1494
        %1588 = vst.msk [vmem:[#allocation2 + $0x20] sm:$0xff] %vm1583, %v1496
        %1589 = vst.msk [vmem:[#allocation2 + $0x28] sm:$0xff] %vm1583, %v1498
        %1590 = vst.msk [vmem:[#allocation2 + $0x30] sm:$0xff] %vm1583, %v1500
        %1591 = vst.msk [vmem:[#allocation2 + $0x38] sm:$0xff] %vm1583, %v1502
        %1592 = vst.msk [vmem:[#allocation2 + $0x40] sm:$0xff] %vm1583, %v1504
        %1593 = vst.msk [vmem:[#allocation2 + $0x48] sm:$0xff] %vm1583, %v1506
        %1594 = vst.msk [vmem:[#allocation2 + $0x50] sm:$0xff] %vm1583, %v1508
        %1595 = vst.msk [vmem:[#allocation2 + $0x58] sm:$0xff] %vm1583, %v1510
        %1596 = vst.msk [vmem:[#allocation2 + $0x60] sm:$0xff] %vm1583, %v1512
        %1597 = vst.msk [vmem:[#allocation2 + $0x68] sm:$0xff] %vm1583, %v1514
        %1598 = vst.msk [vmem:[#allocation2 + $0x70] sm:$0xff] %vm1583, %v1516
        %1599 = vst.msk [vmem:[#allocation2 + $0x78] sm:$0xff] %vm1583, %v1518
        %1600 = vst.msk [vmem:[#allocation2 + $0x80] sm:$0xff] %vm1583, %v1520
        %1601 = vst.msk [vmem:[#allocation2 + $0x88] sm:$0xff] %vm1583, %v1522
        %1602 = vst.msk [vmem:[#allocation2 + $0x90] sm:$0xff] %vm1583, %v1524
        %1603 = vst.msk [vmem:[#allocation2 + $0x98] sm:$0xff] %vm1583, %v1526
        %1604 = vst.msk [vmem:[#allocation2 + $0xa0] sm:$0xff] %vm1583, %v1528
        %1605 = vst.msk [vmem:[#allocation2 + $0xa8] sm:$0xff] %vm1583, %v1530
        %1606 = vst.msk [vmem:[#allocation2 + $0xb0] sm:$0xff] %vm1583, %v1532
        %1607 = vst.msk [vmem:[#allocation2 + $0xb8] sm:$0xff] %vm1583, %v1534
        %1608 = vst.msk [vmem:[#allocation2 + $0xc0] sm:$0xff] %vm1583, %v1536
        %1609 = vst.msk [vmem:[#allocation2 + $0xc8] sm:$0xff] %vm1583, %v1538
        %1610 = vst.msk [vmem:[#allocation2 + $0xd0] sm:$0xff] %vm1583, %v1540
        %1611 = vst.msk [vmem:[#allocation2 + $0xd8] sm:$0xff] %vm1583, %v1542
        %1612 = vst.msk [vmem:[#allocation2 + $0xe0] sm:$0xff] %vm1583, %v1544
        %1613 = vst.msk [vmem:[#allocation2 + $0xe8] sm:$0xff] %vm1583, %v1546
        %1614 = vst.msk [vmem:[#allocation2 + $0xf0] sm:$0xff] %vm1583, %v1548
        %1615 = vst.msk [vmem:[#allocation2 + $0xf8] sm:$0xff] %vm1583, %v1550
        %v1616 = vld [vmem:[%s1229 + $0x2] sm:$0xff]
        %v1617 = vld [vmem:[%s1229 + $0xa] sm:$0xff]
        %v1618 = vld [vmem:[%s1229 + $0x1a] sm:$0xff]
        %v1619 = vld [vmem:[%s1229 + $0x22] sm:$0xff]
        %v1620 = vld [vmem:[%s1229 + $0x32] sm:$0xff]
        %v1621 = vld [vmem:[%s1229 + $0x3a] sm:$0xff]
        %v1622 = vld [vmem:[%s1229 + $0x4a] sm:$0xff]
        %v1623 = vld [vmem:[%s1229 + $0x52] sm:$0xff]
        %v1624 = vld [vmem:[%s1229 + $0x62] sm:$0xff]
        %v1625 = vld [vmem:[%s1229 + $0x6a] sm:$0xff]
        %v1626 = vld [vmem:[%s1229 + $0x7a] sm:$0xff]
        %v1627 = vld [vmem:[%s1229 + $0x82] sm:$0xff]
        %v1628 = vld [vmem:[%s1229 + $0x92] sm:$0xff]
        %v1629 = vld [vmem:[%s1229 + $0x9a] sm:$0xff]
        %v1630 = vld [vmem:[%s1229 + $0xaa] sm:$0xff]
        %v1631 = vld [vmem:[%s1229 + $0xb2] sm:$0xff]
        %v1632 = vld [vmem:[%s1229 + $0xc2] sm:$0xff]
        %v1633 = vld [vmem:[%s1229 + $0xca] sm:$0xff]
        %v1634 = vld [vmem:[%s1229 + $0xda] sm:$0xff]
        %v1635 = vld [vmem:[%s1229 + $0xe2] sm:$0xff]
        %v1636 = vld [vmem:[%s1229 + $0xf2] sm:$0xff]
        %v1637 = vld [vmem:[%s1229 + $0xfa] sm:$0xff]
        %v1638 = vld [vmem:[%s1229 + $0x10a] sm:$0xff]
        %v1639 = vld [vmem:[%s1229 + $0x112] sm:$0xff]
        %v1640 = vld [vmem:[%s1229 + $0x122] sm:$0xff]
        %v1641 = vld [vmem:[%s1229 + $0x12a] sm:$0xff]
        %v1642 = vld [vmem:[%s1229 + $0x13a] sm:$0xff]
        %v1643 = vld [vmem:[%s1229 + $0x142] sm:$0xff]
        %v1644 = vld [vmem:[%s1229 + $0x152] sm:$0xff]
        %v1645 = vld [vmem:[%s1229 + $0x15a] sm:$0xff]
        %v1646 = vld [vmem:[%s1229 + $0x16a] sm:$0xff]
        %v1647 = vld [vmem:[%s1229 + $0x172] sm:$0xff]
        %1680 = vrot.lane.b32.xlu0 %v1616, 32
        %v1681 = vpop.permute.xlu0 %1680
        %1682 = vrot.lane.b32.xlu0 %v1617, 32
        %v1683 = vpop.permute.xlu0 %1682
        %1684 = vrot.lane.b32.xlu0 %v1618, 32
        %v1685 = vpop.permute.xlu0 %1684
        %1686 = vrot.lane.b32.xlu0 %v1619, 32
        %v1687 = vpop.permute.xlu0 %1686
        %1688 = vrot.lane.b32.xlu0 %v1620, 32
        %v1689 = vpop.permute.xlu0 %1688
        %1690 = vrot.lane.b32.xlu0 %v1621, 32
        %v1691 = vpop.permute.xlu0 %1690
        %1692 = vrot.lane.b32.xlu0 %v1622, 32
        %v1693 = vpop.permute.xlu0 %1692
        %1694 = vrot.lane.b32.xlu0 %v1623, 32
        %v1695 = vpop.permute.xlu0 %1694
        %1696 = vrot.lane.b32.xlu0 %v1624, 32
        %v1697 = vpop.permute.xlu0 %1696
        %1698 = vrot.lane.b32.xlu0 %v1625, 32
        %v1699 = vpop.permute.xlu0 %1698
        %1700 = vrot.lane.b32.xlu0 %v1626, 32
        %v1701 = vpop.permute.xlu0 %1700
        %1702 = vrot.lane.b32.xlu0 %v1627, 32
        %v1703 = vpop.permute.xlu0 %1702
        %1704 = vrot.lane.b32.xlu0 %v1628, 32
        %v1705 = vpop.permute.xlu0 %1704
        %1706 = vrot.lane.b32.xlu0 %v1629, 32
        %v1707 = vpop.permute.xlu0 %1706
        %1708 = vrot.lane.b32.xlu0 %v1630, 32
        %v1709 = vpop.permute.xlu0 %1708
        %1710 = vrot.lane.b32.xlu0 %v1631, 32
        %v1711 = vpop.permute.xlu0 %1710
        %1712 = vrot.lane.b32.xlu0 %v1632, 32
        %v1713 = vpop.permute.xlu0 %1712
        %1714 = vrot.lane.b32.xlu0 %v1633, 32
        %v1715 = vpop.permute.xlu0 %1714
        %1716 = vrot.lane.b32.xlu0 %v1634, 32
        %v1717 = vpop.permute.xlu0 %1716
        %1718 = vrot.lane.b32.xlu0 %v1635, 32
        %v1719 = vpop.permute.xlu0 %1718
        %1720 = vrot.lane.b32.xlu0 %v1636, 32
        %v1721 = vpop.permute.xlu0 %1720
        %1722 = vrot.lane.b32.xlu0 %v1637, 32
        %v1723 = vpop.permute.xlu0 %1722
        %1724 = vrot.lane.b32.xlu0 %v1638, 32
        %v1725 = vpop.permute.xlu0 %1724
        %1726 = vrot.lane.b32.xlu0 %v1639, 32
        %v1727 = vpop.permute.xlu0 %1726
        %1728 = vrot.lane.b32.xlu0 %v1640, 32
        %v1729 = vpop.permute.xlu0 %1728
        %1730 = vrot.lane.b32.xlu0 %v1641, 32
        %v1731 = vpop.permute.xlu0 %1730
        %1732 = vrot.lane.b32.xlu0 %v1642, 32
        %v1733 = vpop.permute.xlu0 %1732
        %1734 = vrot.lane.b32.xlu0 %v1643, 32
        %v1735 = vpop.permute.xlu0 %1734
        %1736 = vrot.lane.b32.xlu0 %v1644, 32
        %v1737 = vpop.permute.xlu0 %1736
        %1738 = vrot.lane.b32.xlu0 %v1645, 32
        %v1739 = vpop.permute.xlu0 %1738
        %1740 = vrot.lane.b32.xlu0 %v1646, 32
        %v1741 = vpop.permute.xlu0 %1740
        %1742 = vrot.lane.b32.xlu0 %v1647, 32
        %v1743 = vpop.permute.xlu0 %1742
        %vm1776 = vcmask 294144
        %1777 = vst.msk [vmem:[#allocation2] sm:$0xff] %vm1776, %v1681
        %1778 = vst.msk [vmem:[#allocation2 + $0x8] sm:$0xff] %vm1776, %v1683
        %1779 = vst.msk [vmem:[#allocation2 + $0x10] sm:$0xff] %vm1776, %v1685
        %1780 = vst.msk [vmem:[#allocation2 + $0x18] sm:$0xff] %vm1776, %v1687
        %1781 = vst.msk [vmem:[#allocation2 + $0x20] sm:$0xff] %vm1776, %v1689
        %1782 = vst.msk [vmem:[#allocation2 + $0x28] sm:$0xff] %vm1776, %v1691
        %1783 = vst.msk [vmem:[#allocation2 + $0x30] sm:$0xff] %vm1776, %v1693
        %1784 = vst.msk [vmem:[#allocation2 + $0x38] sm:$0xff] %vm1776, %v1695
        %1785 = vst.msk [vmem:[#allocation2 + $0x40] sm:$0xff] %vm1776, %v1697
        %1786 = vst.msk [vmem:[#allocation2 + $0x48] sm:$0xff] %vm1776, %v1699
        %1787 = vst.msk [vmem:[#allocation2 + $0x50] sm:$0xff] %vm1776, %v1701
        %1788 = vst.msk [vmem:[#allocation2 + $0x58] sm:$0xff] %vm1776, %v1703
        %1789 = vst.msk [vmem:[#allocation2 + $0x60] sm:$0xff] %vm1776, %v1705
        %1790 = vst.msk [vmem:[#allocation2 + $0x68] sm:$0xff] %vm1776, %v1707
        %1791 = vst.msk [vmem:[#allocation2 + $0x70] sm:$0xff] %vm1776, %v1709
        %1792 = vst.msk [vmem:[#allocation2 + $0x78] sm:$0xff] %vm1776, %v1711
        %1793 = vst.msk [vmem:[#allocation2 + $0x80] sm:$0xff] %vm1776, %v1713
        %1794 = vst.msk [vmem:[#allocation2 + $0x88] sm:$0xff] %vm1776, %v1715
        %1795 = vst.msk [vmem:[#allocation2 + $0x90] sm:$0xff] %vm1776, %v1717
        %1796 = vst.msk [vmem:[#allocation2 + $0x98] sm:$0xff] %vm1776, %v1719
        %1797 = vst.msk [vmem:[#allocation2 + $0xa0] sm:$0xff] %vm1776, %v1721
        %1798 = vst.msk [vmem:[#allocation2 + $0xa8] sm:$0xff] %vm1776, %v1723
        %1799 = vst.msk [vmem:[#allocation2 + $0xb0] sm:$0xff] %vm1776, %v1725
        %1800 = vst.msk [vmem:[#allocation2 + $0xb8] sm:$0xff] %vm1776, %v1727
        %1801 = vst.msk [vmem:[#allocation2 + $0xc0] sm:$0xff] %vm1776, %v1729
        %1802 = vst.msk [vmem:[#allocation2 + $0xc8] sm:$0xff] %vm1776, %v1731
        %1803 = vst.msk [vmem:[#allocation2 + $0xd0] sm:$0xff] %vm1776, %v1733
        %1804 = vst.msk [vmem:[#allocation2 + $0xd8] sm:$0xff] %vm1776, %v1735
        %1805 = vst.msk [vmem:[#allocation2 + $0xe0] sm:$0xff] %vm1776, %v1737
        %1806 = vst.msk [vmem:[#allocation2 + $0xe8] sm:$0xff] %vm1776, %v1739
        %1807 = vst.msk [vmem:[#allocation2 + $0xf0] sm:$0xff] %vm1776, %v1741
        %1808 = vst.msk [vmem:[#allocation2 + $0xf8] sm:$0xff] %vm1776, %v1743
        %v1809 = vld [vmem:[#allocation2] sm:$0xff]
        %v1810 = vld [vmem:[#allocation2 + $0x8] sm:$0xff]
        %v1811 = vld [vmem:[#allocation2 + $0x10] sm:$0xff]
        %v1812 = vld [vmem:[#allocation2 + $0x18] sm:$0xff]
        %v1813 = vld [vmem:[#allocation2 + $0x20] sm:$0xff]
        %v1814 = vld [vmem:[#allocation2 + $0x28] sm:$0xff]
        %v1815 = vld [vmem:[#allocation2 + $0x30] sm:$0xff]
        %v1816 = vld [vmem:[#allocation2 + $0x38] sm:$0xff]
        %v1817 = vld [vmem:[#allocation2 + $0x40] sm:$0xff]
        %v1818 = vld [vmem:[#allocation2 + $0x48] sm:$0xff]
        %v1819 = vld [vmem:[#allocation2 + $0x50] sm:$0xff]
        %v1820 = vld [vmem:[#allocation2 + $0x58] sm:$0xff]
        %v1821 = vld [vmem:[#allocation2 + $0x60] sm:$0xff]
        %v1822 = vld [vmem:[#allocation2 + $0x68] sm:$0xff]
        %v1823 = vld [vmem:[#allocation2 + $0x70] sm:$0xff]
        %v1824 = vld [vmem:[#allocation2 + $0x78] sm:$0xff]
        %v1825 = vld [vmem:[#allocation2 + $0x80] sm:$0xff]
        %v1826 = vld [vmem:[#allocation2 + $0x88] sm:$0xff]
        %v1827 = vld [vmem:[#allocation2 + $0x90] sm:$0xff]
        %v1828 = vld [vmem:[#allocation2 + $0x98] sm:$0xff]
        %v1829 = vld [vmem:[#allocation2 + $0xa0] sm:$0xff]
        %v1830 = vld [vmem:[#allocation2 + $0xa8] sm:$0xff]
        %v1831 = vld [vmem:[#allocation2 + $0xb0] sm:$0xff]
        %v1832 = vld [vmem:[#allocation2 + $0xb8] sm:$0xff]
        %v1833 = vld [vmem:[#allocation2 + $0xc0] sm:$0xff]
        %v1834 = vld [vmem:[#allocation2 + $0xc8] sm:$0xff]
        %v1835 = vld [vmem:[#allocation2 + $0xd0] sm:$0xff]
        %v1836 = vld [vmem:[#allocation2 + $0xd8] sm:$0xff]
        %v1837 = vld [vmem:[#allocation2 + $0xe0] sm:$0xff]
        %v1838 = vld [vmem:[#allocation2 + $0xe8] sm:$0xff]
        %v1839 = vld [vmem:[#allocation2 + $0xf0] sm:$0xff]
        %v1840 = vld [vmem:[#allocation2 + $0xf8] sm:$0xff]
        %v1841 = vld [vmem:[#allocation6] sm:$0xff]
        %v1842 = vld [vmem:[#allocation6 + $0x8] sm:$0xff]
        %v1843 = vld [vmem:[#allocation6 + $0x10] sm:$0xff]
        %v1844 = vld [vmem:[#allocation6 + $0x18] sm:$0xff]
        %v1845 = vld [vmem:[#allocation6 + $0x20] sm:$0xf]
        %vm1846 = vcmask 293888
        %v1848 = vsel %vm1846, %v1809, 0
        %v1851 = vsel %vm1846, %v1810, 0
        %v1854 = vsel %vm1846, %v1811, 0
        %v1857 = vsel %vm1846, %v1812, 0
        %v1860 = vsel %vm1846, %v1813, 0
        %v1863 = vsel %vm1846, %v1814, 0
        %v1866 = vsel %vm1846, %v1815, 0
        %v1869 = vsel %vm1846, %v1816, 0
        %v1872 = vsel %vm1846, %v1817, 0
        %v1875 = vsel %vm1846, %v1818, 0
        %v1878 = vsel %vm1846, %v1819, 0
        %v1881 = vsel %vm1846, %v1820, 0
        %v1884 = vsel %vm1846, %v1821, 0
        %v1887 = vsel %vm1846, %v1822, 0
        %v1890 = vsel %vm1846, %v1823, 0
        %v1893 = vsel %vm1846, %v1824, 0
        %v1896 = vsel %vm1846, %v1825, 0
        %v1899 = vsel %vm1846, %v1826, 0
        %v1902 = vsel %vm1846, %v1827, 0
        %v1905 = vsel %vm1846, %v1828, 0
        %v1908 = vsel %vm1846, %v1829, 0
        %v1911 = vsel %vm1846, %v1830, 0
        %v1914 = vsel %vm1846, %v1831, 0
        %v1917 = vsel %vm1846, %v1832, 0
        %v1920 = vsel %vm1846, %v1833, 0
        %v1923 = vsel %vm1846, %v1834, 0
        %v1926 = vsel %vm1846, %v1835, 0
        %v1929 = vsel %vm1846, %v1836, 0
        %v1932 = vsel %vm1846, %v1837, 0
        %v1935 = vsel %vm1846, %v1838, 0
        %v1938 = vsel %vm1846, %v1839, 0
        %v1941 = vsel %vm1846, %v1840, 0
        %vm1943 = vcmask 1043456
        %v1945 = vsel %vm1943, %v1845, 0
        %1947 = vmatprep.subr.mxu0 0.0
        %1948 = vmatpush1.msra.mxu0 %v1841
        %1949 = vmatprep.subr.mxu0 0.0
        %1950 = vmatpush1.msra.mxu0 %v1842
        %1951 = vmatprep.subr.mxu0 0.0
        %1952 = vmatpush1.msra.mxu0 %v1843
        %1953 = vmatprep.subr.mxu0 0.0
        %1954 = vmatpush1.msra.mxu0 %v1844
        %1955 = vmatprep.subr.mxu0 0.0
        %1956 = vmatpush1.msra.mxu0 %v1945
        %1957 = vmatprep.subr.mxu0 0.0
        %1958 = vmatpush1.msra.mxu0 0.0
        %1959 = vmatprep.subr.mxu0 0.0
        %1960 = vmatpush1.msra.mxu0 0.0
        %1961 = vmatprep.subr.mxu0 0.0
        %1962 = vmatpush1.msra.mxu0 0.0
        %1963 = vmatprep.subr.mxu0 0.0
        %1964 = vmatpush1.msra.mxu0 0.0
        %1965 = vmatprep.subr.mxu0 0.0
        %1966 = vmatpush1.msra.mxu0 0.0
        %1967 = vmatprep.subr.mxu0 0.0
        %1968 = vmatpush1.msra.mxu0 0.0
        %1969 = vmatprep.subr.mxu0 0.0
        %1970 = vmatpush1.msra.mxu0 0.0
        %1971 = vmatprep.subr.mxu0 0.0
        %1972 = vmatpush1.msra.mxu0 0.0
        %1973 = vmatprep.subr.mxu0 0.0
        %1974 = vmatpush1.msra.mxu0 0.0
        %1975 = vmatprep.subr.mxu0 0.0
        %1976 = vmatpush1.msra.mxu0 0.0
        %1977 = vmatprep.subr.mxu0 0.0
        %1978 = vmatpush1.msra.mxu0 0.0
        %1979 = vmatprep.subr.mxu0 0.0
        %1980 = vmatpush1.msra.mxu0 0.0
        %1981 = vmatprep.subr.mxu0 0.0
        %1982 = vmatpush1.msra.mxu0 0.0
        %1983 = vmatprep.subr.mxu0 0.0
        %1984 = vmatpush1.msra.mxu0 0.0
        %1985 = vmatprep.subr.mxu0 0.0
        %1986 = vmatpush1.msra.mxu0 0.0
        %1987 = vmatprep.subr.mxu0 0.0
        %1988 = vmatpush1.msra.mxu0 0.0
        %1989 = vmatprep.subr.mxu0 0.0
        %1990 = vmatpush1.msra.mxu0 0.0
        %1991 = vmatprep.subr.mxu0 0.0
        %1992 = vmatpush1.msra.mxu0 0.0
        %1993 = vmatprep.subr.mxu0 0.0
        %1994 = vmatpush1.msra.mxu0 0.0
        %1995 = vmatprep.subr.mxu0 0.0
        %1996 = vmatpush1.msra.mxu0 0.0
        %1997 = vmatprep.subr.mxu0 0.0
        %1998 = vmatpush1.msra.mxu0 0.0
        %1999 = vmatprep.subr.mxu0 0.0
        %2000 = vmatpush1.msra.mxu0 0.0
        %2001 = vmatprep.subr.mxu0 0.0
        %2002 = vmatpush1.msra.mxu0 0.0
        %2003 = vmatprep.subr.mxu0 0.0
        %2004 = vmatpush1.msra.mxu0 0.0
        %2005 = vmatprep.subr.mxu0 0.0
        %2006 = vmatpush1.msra.mxu0 0.0
        %2007 = vmatprep.subr.mxu0 0.0
        %2008 = vmatpush1.msra.mxu0 0.0
        %2009 = vmatprep.subr.mxu0 0.0
        %2010 = vmatpush1.msra.mxu0 0.0
        %2011 = vmatprep.mubr.f32.mxu0 0.0
        %2012 = vmatmul.mubr.f32.gmra.mrb[0].mxu0 %v1848
        %v2013 = vpop.f32.mrb[0].mxu0
        %v2014 = vadd.f32 0.0, %v2013
        %v2015 = vpop.f32.mrb[0].mxu0
        %2016 = vmatprep.mubr.f32.mxu0 0.0
        %2017 = vmatmul.mubr.f32.gmra.mrb[0].mxu0 %v1851
        %v2018 = vpop.f32.mrb[0].mxu0
        %v2019 = vadd.f32 0.0, %v2018
        %v2020 = vpop.f32.mrb[0].mxu0
        %2021 = vmatprep.mubr.f32.mxu0 0.0
        %2022 = vmatmul.mubr.f32.gmra.mrb[0].mxu0 %v1854
        %v2023 = vpop.f32.mrb[0].mxu0
        %v2024 = vadd.f32 0.0, %v2023
        %v2025 = vpop.f32.mrb[0].mxu0
        %2026 = vmatprep.mubr.f32.mxu0 0.0
        %2027 = vmatmul.mubr.f32.gmra.mrb[0].mxu0 %v1857
        %v2028 = vpop.f32.mrb[0].mxu0
        %v2029 = vadd.f32 0.0, %v2028
        %v2030 = vpop.f32.mrb[0].mxu0
        %2031 = vmatprep.mubr.f32.mxu0 0.0
        %2032 = vmatmul.mubr.f32.gmra.mrb[0].mxu0 %v1860
        %v2033 = vpop.f32.mrb[0].mxu0
        %v2034 = vadd.f32 0.0, %v2033
        %v2035 = vpop.f32.mrb[0].mxu0
        %2036 = vmatprep.mubr.f32.mxu0 0.0
        %2037 = vmatmul.mubr.f32.gmra.mrb[0].mxu0 %v1863
        %v2038 = vpop.f32.mrb[0].mxu0
        %v2039 = vadd.f32 0.0, %v2038
        %v2040 = vpop.f32.mrb[0].mxu0
        %2041 = vmatprep.mubr.f32.mxu0 0.0
        %2042 = vmatmul.mubr.f32.gmra.mrb[0].mxu0 %v1866
        %v2043 = vpop.f32.mrb[0].mxu0
        %v2044 = vadd.f32 0.0, %v2043
        %v2045 = vpop.f32.mrb[0].mxu0
        %2046 = vmatprep.mubr.f32.mxu0 0.0
        %2047 = vmatmul.mubr.f32.gmra.mrb[0].mxu0 %v1869
        %v2048 = vpop.f32.mrb[0].mxu0
        %v2049 = vadd.f32 0.0, %v2048
        %v2050 = vpop.f32.mrb[0].mxu0
        %2051 = vmatprep.mubr.f32.mxu0 0.0
        %2052 = vmatmul.mubr.f32.gmra.mrb[0].mxu0 %v1872
        %v2053 = vpop.f32.mrb[0].mxu0
        %v2054 = vadd.f32 0.0, %v2053
        %v2055 = vpop.f32.mrb[0].mxu0
        %2056 = vmatprep.mubr.f32.mxu0 0.0
        %2057 = vmatmul.mubr.f32.gmra.mrb[0].mxu0 %v1875
        %v2058 = vpop.f32.mrb[0].mxu0
        %v2059 = vadd.f32 0.0, %v2058
        %v2060 = vpop.f32.mrb[0].mxu0
        %2061 = vmatprep.mubr.f32.mxu0 0.0
        %2062 = vmatmul.mubr.f32.gmra.mrb[0].mxu0 %v1878
        %v2063 = vpop.f32.mrb[0].mxu0
        %v2064 = vadd.f32 0.0, %v2063
        %v2065 = vpop.f32.mrb[0].mxu0
        %2066 = vmatprep.mubr.f32.mxu0 0.0
        %2067 = vmatmul.mubr.f32.gmra.mrb[0].mxu0 %v1881
        %v2068 = vpop.f32.mrb[0].mxu0
        %v2069 = vadd.f32 0.0, %v2068
        %v2070 = vpop.f32.mrb[0].mxu0
        %2071 = vmatprep.mubr.f32.mxu0 0.0
        %2072 = vmatmul.mubr.f32.gmra.mrb[0].mxu0 %v1884
        %v2073 = vpop.f32.mrb[0].mxu0
        %v2074 = vadd.f32 0.0, %v2073
        %v2075 = vpop.f32.mrb[0].mxu0
        %2076 = vmatprep.mubr.f32.mxu0 0.0
        %2077 = vmatmul.mubr.f32.gmra.mrb[0].mxu0 %v1887
        %v2078 = vpop.f32.mrb[0].mxu0
        %v2079 = vadd.f32 0.0, %v2078
        %v2080 = vpop.f32.mrb[0].mxu0
        %2081 = vmatprep.mubr.f32.mxu0 0.0
        %2082 = vmatmul.mubr.f32.gmra.mrb[0].mxu0 %v1890
        %v2083 = vpop.f32.mrb[0].mxu0
        %v2084 = vadd.f32 0.0, %v2083
        %v2085 = vpop.f32.mrb[0].mxu0
        %2086 = vmatprep.mubr.f32.mxu0 0.0
        %2087 = vmatmul.mubr.f32.gmra.mrb[0].mxu0 %v1893
        %v2088 = vpop.f32.mrb[0].mxu0
        %v2089 = vadd.f32 0.0, %v2088
        %v2090 = vpop.f32.mrb[0].mxu0
        %2091 = vmatprep.mubr.f32.mxu0 0.0
        %2092 = vmatmul.mubr.f32.gmra.mrb[0].mxu0 %v1896
        %v2093 = vpop.f32.mrb[0].mxu0
        %v2094 = vadd.f32 0.0, %v2093
        %v2095 = vpop.f32.mrb[0].mxu0
        %2096 = vmatprep.mubr.f32.mxu0 0.0
        %2097 = vmatmul.mubr.f32.gmra.mrb[0].mxu0 %v1899
        %v2098 = vpop.f32.mrb[0].mxu0
        %v2099 = vadd.f32 0.0, %v2098
        %v2100 = vpop.f32.mrb[0].mxu0
        %2101 = vmatprep.mubr.f32.mxu0 0.0
        %2102 = vmatmul.mubr.f32.gmra.mrb[0].mxu0 %v1902
        %v2103 = vpop.f32.mrb[0].mxu0
        %v2104 = vadd.f32 0.0, %v2103
        %v2105 = vpop.f32.mrb[0].mxu0
        %2106 = vmatprep.mubr.f32.mxu0 0.0
        %2107 = vmatmul.mubr.f32.gmra.mrb[0].mxu0 %v1905
        %v2108 = vpop.f32.mrb[0].mxu0
        %v2109 = vadd.f32 0.0, %v2108
        %v2110 = vpop.f32.mrb[0].mxu0
        %2111 = vmatprep.mubr.f32.mxu0 0.0
        %2112 = vmatmul.mubr.f32.gmra.mrb[0].mxu0 %v1908
        %v2113 = vpop.f32.mrb[0].mxu0
        %v2114 = vadd.f32 0.0, %v2113
        %v2115 = vpop.f32.mrb[0].mxu0
        %2116 = vmatprep.mubr.f32.mxu0 0.0
        %2117 = vmatmul.mubr.f32.gmra.mrb[0].mxu0 %v1911
        %v2118 = vpop.f32.mrb[0].mxu0
        %v2119 = vadd.f32 0.0, %v2118
        %v2120 = vpop.f32.mrb[0].mxu0
        %2121 = vmatprep.mubr.f32.mxu0 0.0
        %2122 = vmatmul.mubr.f32.gmra.mrb[0].mxu0 %v1914
        %v2123 = vpop.f32.mrb[0].mxu0
        %v2124 = vadd.f32 0.0, %v2123
        %v2125 = vpop.f32.mrb[0].mxu0
        %2126 = vmatprep.mubr.f32.mxu0 0.0
        %2127 = vmatmul.mubr.f32.gmra.mrb[0].mxu0 %v1917
        %v2128 = vpop.f32.mrb[0].mxu0
        %v2129 = vadd.f32 0.0, %v2128
        %v2130 = vpop.f32.mrb[0].mxu0
        %2131 = vmatprep.mubr.f32.mxu0 0.0
        %2132 = vmatmul.mubr.f32.gmra.mrb[0].mxu0 %v1920
        %v2133 = vpop.f32.mrb[0].mxu0
        %v2134 = vadd.f32 0.0, %v2133
        %v2135 = vpop.f32.mrb[0].mxu0
        %2136 = vmatprep.mubr.f32.mxu0 0.0
        %2137 = vmatmul.mubr.f32.gmra.mrb[0].mxu0 %v1923
        %v2138 = vpop.f32.mrb[0].mxu0
        %v2139 = vadd.f32 0.0, %v2138
        %v2140 = vpop.f32.mrb[0].mxu0
        %2141 = vmatprep.mubr.f32.mxu0 0.0
        %2142 = vmatmul.mubr.f32.gmra.mrb[0].mxu0 %v1926
        %v2143 = vpop.f32.mrb[0].mxu0
        %v2144 = vadd.f32 0.0, %v2143
        %v2145 = vpop.f32.mrb[0].mxu0
        %2146 = vmatprep.mubr.f32.mxu0 0.0
        %2147 = vmatmul.mubr.f32.gmra.mrb[0].mxu0 %v1929
        %v2148 = vpop.f32.mrb[0].mxu0
        %v2149 = vadd.f32 0.0, %v2148
        %v2150 = vpop.f32.mrb[0].mxu0
        %2151 = vmatprep.mubr.f32.mxu0 0.0
        %2152 = vmatmul.mubr.f32.gmra.mrb[0].mxu0 %v1932
        %v2153 = vpop.f32.mrb[0].mxu0
        %v2154 = vadd.f32 0.0, %v2153
        %v2155 = vpop.f32.mrb[0].mxu0
        %2156 = vmatprep.mubr.f32.mxu0 0.0
        %2157 = vmatmul.mubr.f32.gmra.mrb[0].mxu0 %v1935
        %v2158 = vpop.f32.mrb[0].mxu0
        %v2159 = vadd.f32 0.0, %v2158
        %v2160 = vpop.f32.mrb[0].mxu0
        %2161 = vmatprep.mubr.f32.mxu0 0.0
        %2162 = vmatmul.mubr.f32.gmra.mrb[0].mxu0 %v1938
        %v2163 = vpop.f32.mrb[0].mxu0
        %v2164 = vadd.f32 0.0, %v2163
        %v2165 = vpop.f32.mrb[0].mxu0
        %2166 = vmatprep.mubr.f32.mxu0 0.0
        %2167 = vmatmul.mubr.f32.gmra.mrb[0].mxu0 %v1941
        %v2168 = vpop.f32.mrb[0].mxu0
        %v2169 = vadd.f32 0.0, %v2168
        %v2170 = vpop.f32.mrb[0].mxu0
        %2171 = vdwg.mxu0
        %v2172 = vadd.f32 %v2014, %v2019
        %v2173 = vadd.f32 %v2172, %v2024
        %v2174 = vadd.f32 %v2173, %v2029
        %v2175 = vadd.f32 %v2174, %v2034
        %v2176 = vadd.f32 %v2175, %v2039
        %v2177 = vadd.f32 %v2176, %v2044
        %v2178 = vadd.f32 %v2177, %v2049
        %v2179 = vadd.f32 %v2178, %v2054
        %v2180 = vadd.f32 %v2179, %v2059
        %v2181 = vadd.f32 %v2180, %v2064
        %v2182 = vadd.f32 %v2181, %v2069
        %v2183 = vadd.f32 %v2182, %v2074
        %v2184 = vadd.f32 %v2183, %v2079
        %v2185 = vadd.f32 %v2184, %v2084
        %v2186 = vadd.f32 %v2185, %v2089
        %v2187 = vadd.f32 %v2186, %v2094
        %v2188 = vadd.f32 %v2187, %v2099
        %v2189 = vadd.f32 %v2188, %v2104
        %v2190 = vadd.f32 %v2189, %v2109
        %v2191 = vadd.f32 %v2190, %v2114
        %v2192 = vadd.f32 %v2191, %v2119
        %v2193 = vadd.f32 %v2192, %v2124
        %v2194 = vadd.f32 %v2193, %v2129
        %v2195 = vadd.f32 %v2194, %v2134
        %v2196 = vadd.f32 %v2195, %v2139
        %v2197 = vadd.f32 %v2196, %v2144
        %v2198 = vadd.f32 %v2197, %v2149
        %v2199 = vadd.f32 %v2198, %v2154
        %v2200 = vadd.f32 %v2199, %v2159
        %v2201 = vadd.f32 %v2200, %v2164
        %v2202 = vadd.f32 %v2201, %v2169
        %v2203 = vrot.slane %v2202, 4
        %v2204 = vadd.f32 %v2202, %v2203
        %v2205 = vrot.slane %v2204, 2
        %v2206 = vadd.f32 %v2204, %v2205
        %v2207 = vrot.slane %v2206, 1
        %v2208 = vadd.f32 %v2206, %v2207
        %v2209 = vmul.f32 %v2208, 0.00390625
        %v2210 = vsub.f32 %v2014, %v2209
        %v2211 = vsub.f32 %v2019, %v2209
        %v2212 = vsub.f32 %v2024, %v2209
        %v2213 = vsub.f32 %v2029, %v2209
        %v2214 = vsub.f32 %v2034, %v2209
        %v2215 = vsub.f32 %v2039, %v2209
        %v2216 = vsub.f32 %v2044, %v2209
        %v2217 = vsub.f32 %v2049, %v2209
        %v2218 = vsub.f32 %v2054, %v2209
        %v2219 = vsub.f32 %v2059, %v2209
        %v2220 = vsub.f32 %v2064, %v2209
        %v2221 = vsub.f32 %v2069, %v2209
        %v2222 = vsub.f32 %v2074, %v2209
        %v2223 = vsub.f32 %v2079, %v2209
        %v2224 = vsub.f32 %v2084, %v2209
        %v2225 = vsub.f32 %v2089, %v2209
        %v2226 = vsub.f32 %v2094, %v2209
        %v2227 = vsub.f32 %v2099, %v2209
        %v2228 = vsub.f32 %v2104, %v2209
        %v2229 = vsub.f32 %v2109, %v2209
        %v2230 = vsub.f32 %v2114, %v2209
        %v2231 = vsub.f32 %v2119, %v2209
        %v2232 = vsub.f32 %v2124, %v2209
        %v2233 = vsub.f32 %v2129, %v2209
        %v2234 = vsub.f32 %v2134, %v2209
        %v2235 = vsub.f32 %v2139, %v2209
        %v2236 = vsub.f32 %v2144, %v2209
        %v2237 = vsub.f32 %v2149, %v2209
        %v2238 = vsub.f32 %v2154, %v2209
        %v2239 = vsub.f32 %v2159, %v2209
        %v2240 = vsub.f32 %v2164, %v2209
        %v2241 = vsub.f32 %v2169, %v2209
        %v2242 = vmul.f32 %v2210, %v2210
        %v2243 = vmul.f32 %v2211, %v2211
        %v2244 = vmul.f32 %v2212, %v2212
        %v2245 = vmul.f32 %v2213, %v2213
        %v2246 = vmul.f32 %v2214, %v2214
        %v2247 = vmul.f32 %v2215, %v2215
        %v2248 = vmul.f32 %v2216, %v2216
        %v2249 = vmul.f32 %v2217, %v2217
        %v2250 = vmul.f32 %v2218, %v2218
        %v2251 = vmul.f32 %v2219, %v2219
        %v2252 = vmul.f32 %v2220, %v2220
        %v2253 = vmul.f32 %v2221, %v2221
        %v2254 = vmul.f32 %v2222, %v2222
        %v2255 = vmul.f32 %v2223, %v2223
        %v2256 = vmul.f32 %v2224, %v2224
        %v2257 = vmul.f32 %v2225, %v2225
        %v2258 = vmul.f32 %v2226, %v2226
        %v2259 = vmul.f32 %v2227, %v2227
        %v2260 = vmul.f32 %v2228, %v2228
        %v2261 = vmul.f32 %v2229, %v2229
        %v2262 = vmul.f32 %v2230, %v2230
        %v2263 = vmul.f32 %v2231, %v2231
        %v2264 = vmul.f32 %v2232, %v2232
        %v2265 = vmul.f32 %v2233, %v2233
        %v2266 = vmul.f32 %v2234, %v2234
        %v2267 = vmul.f32 %v2235, %v2235
        %v2268 = vmul.f32 %v2236, %v2236
        %v2269 = vmul.f32 %v2237, %v2237
        %v2270 = vmul.f32 %v2238, %v2238
        %v2271 = vmul.f32 %v2239, %v2239
        %v2272 = vmul.f32 %v2240, %v2240
        %v2273 = vmul.f32 %v2241, %v2241
        %v2274 = vadd.f32 %v2242, %v2243
        %v2275 = vadd.f32 %v2274, %v2244
        %v2276 = vadd.f32 %v2275, %v2245
        %v2277 = vadd.f32 %v2276, %v2246
        %v2278 = vadd.f32 %v2277, %v2247
        %v2279 = vadd.f32 %v2278, %v2248
        %v2280 = vadd.f32 %v2279, %v2249
        %v2281 = vadd.f32 %v2280, %v2250
        %v2282 = vadd.f32 %v2281, %v2251
        %v2283 = vadd.f32 %v2282, %v2252
        %v2284 = vadd.f32 %v2283, %v2253
        %v2285 = vadd.f32 %v2284, %v2254
        %v2286 = vadd.f32 %v2285, %v2255
        %v2287 = vadd.f32 %v2286, %v2256
        %v2288 = vadd.f32 %v2287, %v2257
        %v2289 = vadd.f32 %v2288, %v2258
        %v2290 = vadd.f32 %v2289, %v2259
        %v2291 = vadd.f32 %v2290, %v2260
        %v2292 = vadd.f32 %v2291, %v2261
        %v2293 = vadd.f32 %v2292, %v2262
        %v2294 = vadd.f32 %v2293, %v2263
        %v2295 = vadd.f32 %v2294, %v2264
        %v2296 = vadd.f32 %v2295, %v2265
        %v2297 = vadd.f32 %v2296, %v2266
        %v2298 = vadd.f32 %v2297, %v2267
        %v2299 = vadd.f32 %v2298, %v2268
        %v2300 = vadd.f32 %v2299, %v2269
        %v2301 = vadd.f32 %v2300, %v2270
        %v2302 = vadd.f32 %v2301, %v2271
        %v2303 = vadd.f32 %v2302, %v2272
        %v2304 = vadd.f32 %v2303, %v2273
        %v2305 = vrot.slane %v2304, 4
        %v2306 = vadd.f32 %v2304, %v2305
        %v2307 = vrot.slane %v2306, 2
        %v2308 = vadd.f32 %v2306, %v2307
        %v2309 = vrot.slane %v2308, 1
        %v2310 = vadd.f32 %v2308, %v2309
        %vm2311 = vcmask 1040384
        %v2312 = vsel %vm2311, %v2208, %v2310
        %2313 = vst [vmem:[%s190] sm:$0x3] %v2312
        %s2314 = sand.u32 %s89, 1
        %s2315 = scalar_lea.sflag [#allocation5], %s2314
        %s2316 = sand.u32 %s89, 1
        %s2317 = smul.addr %s2316, 2
        %s2318 = scalar_lea.vmem [#allocation8], %s2317
        // Predicated region
        $region37: #{tpu_custom_call.1} parent=27 // pred_check
          %p2319 = pneg %p99
        $region38: #{tpu_custom_call.1} parent=27 // pred_check_branch
          %2321 = sbr.rel (%p2319) target = $region40
        $region39: #{tpu_custom_call.1} parent=27 // pred_region
          %s2323 = ssub.s32 32, 32
          %2324 = vsyncadd %s2315, %s2323
          %s2325 = sadd.s32 %s25, %s24
          %s2326 = smul.addr %s2325, 32
          %s2327 = scalar_lea.hbm %s2, %s2326
          %s2329 = sshll.u32 %s2318, 4
          %s2330 = int_to_ptr.vmem [resolvable:$true] %s2329
          %2332 = dma.vmem_to_hbm [thread:$0]  %s2330, 32, %s2327, %s2315
        $region40: #{tpu_custom_call.1} parent=27 // pred_fallthru
          _
      $region28: #{tpu_custom_call.1} parent=5 // pred_fallthru
        _
      %p2333 = scmp.le.s32.totalorder 2, %s15
      // Predicated region
      $region41: #{tpu_custom_call.1} parent=5 // pred_check
        %p2334 = pneg %p2333
      $region42: #{tpu_custom_call.1} parent=5 // pred_check_branch
        %2336 = sbr.rel (%p2334) target = $region44
      $region43: #{tpu_custom_call.1} parent=5 // pred_region
        %s2337 = ssub.s32 %s15, 2
        // Predicated region
        $region45: #{tpu_custom_call.1} parent=43 // pred_check
          %p2338 = pneg %p105
        $region46: #{tpu_custom_call.1} parent=43 // pred_check_branch
          %2340 = sbr.rel (%p2338) target = $region48
        $region47: #{tpu_custom_call.1} parent=43 // pred_region
          %s2341 = sand.u32 %s90, 1
          %s2342 = scalar_lea.sflag [#allocation5], %s2341
          %s2343 = sand.u32 %s90, 1
          %s2344 = smul.addr %s2343, 2
          %s2345 = scalar_lea.vmem [#allocation8], %s2344
          %2346 = dma.done %s2342, 32
        $region48: #{tpu_custom_call.1} parent=43 // pred_fallthru
          _
      $region44: #{tpu_custom_call.1} parent=5 // pred_fallthru
        _
    $region6: #{tpu_custom_call.1} parent=1 // loop_footer
      %s19 = sadd.s32 1, %s15
    $region7: #{tpu_custom_call.1} parent=1 // loop_footer_branch
      %14 = sbr.rel target = $region3
    $region8: #{tpu_custom_call.1} parent=1 // loop_exit
      _
    %2347 = vsyncpa [#allocation4], 1
    %s2348 = scalar_lea.sflag [#allocation4], 1
    %2349 = vsyncpa %s2348, 1
    %2350 = vsyncpa [#allocation7], 1
    %2351 = vsyncpa [#allocation5], 1
    %s2352 = scalar_lea.sflag [#allocation5], 1
    %2353 = vsyncpa %s2352, 1

</llo_original>
